<compile_context>
chip_gen: v5e
topology: v5e:2x2
jax: 0.10.0
libtpu: 0.0.40
codegen_flags: <defaults>
</compile_context>

<pallas_src>
import jax
import jax.numpy as jnp
from jax.experimental import pallas as pl
from jax.experimental.pallas import tpu as pltpu


def _head_kernel(wf_ref, b_ref, p0_ref, p1_ref, s0_ref, s1_ref, x_ref, o_ref):
    # wf_ref: SMEM (4*K*C,) fused weights, flat index ((kh*2+kw)*K + k)*C + c
    # b_ref : SMEM (K,)     fused bias
    # p0/p1 : VMEM (W, 2W)  lane-spread matrices  (column w -> column 2w / 2w+1)
    # s0/s1 : VMEM (2Th, Th) sublane-spread matrices (row h -> row 2h / 2h+1)
    # x_ref : VMEM (C, Th, W)      input tile (native NCHW block, n squeezed)
    # o_ref : VMEM (K, 2Th, 2W)    output tile, already in final NK(2H)(2W) layout
    C, Th, W = x_ref.shape
    K = o_ref.shape[0]

    p0 = p0_ref[...]
    p1 = p1_ref[...]
    s0 = s0_ref[...]
    s1 = s1_ref[...]
    xs = [x_ref[c].astype(jnp.float32) for c in range(C)]     # C slabs of (Th, W)

    for k in range(K):
        acc = None
        for kh in range(2):
            # Channel contraction: C is small for a prediction head, so do it as
            # scalar-broadcast VPU FMAs (weights read from SMEM).
            # TODO(synk): for large input_channels switch this to an MXU dot.
            m0 = None
            m1 = None
            for c in range(C):
                w0 = wf_ref[((kh * 2 + 0) * K + k) * C + c]
                w1 = wf_ref[((kh * 2 + 1) * K + k) * C + c]
                m0 = w0 * xs[c] if m0 is None else m0 + w0 * xs[c]
                m1 = w1 * xs[c] if m1 is None else m1 + w1 * xs[c]
            # kw interleave along lanes: column w -> 2w (p0) and 2w+1 (p1).
            n_kh = (jnp.dot(m0, p0, preferred_element_type=jnp.float32)
                    + jnp.dot(m1, p1, preferred_element_type=jnp.float32))   # (Th, 2W)
            # kh interleave along sublanes: row h -> 2h (s0) / 2h+1 (s1).
            s = s0 if kh == 0 else s1
            z = jnp.dot(s, n_kh, preferred_element_type=jnp.float32)          # (2Th, 2W)
            acc = z if acc is None else acc + z
        # Dense, unmasked store straight into the final layout.
        o_ref[k] = (acc + b_ref[k]).astype(o_ref.dtype)


def _choose_tile_h(N, C, H, W, K, target_step_bytes=2 << 20):
    """Pick tile_h dividing H: multiples of 8 (input-block sublane rule), grown
    toward ~2 MiB of HBM traffic per step, while keeping >= 4 grid steps so the
    'parallel' grid shards cleanly across v7x's 2 TensorCores."""
    cands = [t for t in range(8, H + 1, 8) if H % t == 0]
    if not cands:
        cands = [H]                              # fall back to a full-height block
    bytes_per_row = 4 * W * (C + 4 * K)          # f32 x-read + out-write per input row
    best = cands[0]
    for t in cands:
        if t * bytes_per_row <= target_step_bytes and N * (H // t) >= 4:
            best = max(best, t)
    return best


def prediction_head(x, wt, bt, wc, bc, *, tile_h=None):
    """x: (N, C, H, W); wt: (C, C, 2, 2) ConvTranspose2d weight; bt: (C,);
    wc: (K, C, 1, 1) 1x1 Conv2d weight; bc: (K,).  Returns (N, K, 2H, 2W)."""
    N, C, H, W = x.shape
    K = wc.shape[0]

    # ---- tiny wrapper-side weight fusion (weights only; no big-tensor work) ----
    wc2 = wc.reshape(K, C)                                       # (K, C_out)
    w_fused = jnp.einsum('cdab,kd->abkc', wt, wc2)               # (kh, kw, k, c)
    wf_flat = w_fused.astype(jnp.float32).reshape(4 * K * C)
    b_fused = (wc2 @ bt + bc).astype(jnp.float32)                # (K,)

    if tile_h is None:
        tile_h = _choose_tile_h(N, C, H, W, K)
    assert H % tile_h == 0, (H, tile_h)
    n_row_tiles = H // tile_h

    # Constant 0/1 spread matrices (exact selection in f32, run on the idle MXU).
    cw = jnp.arange(2 * W)[None, :]
    rw = jnp.arange(W)[:, None]
    p0 = (cw == 2 * rw).astype(jnp.float32)                      # (W, 2W)
    p1 = (cw == 2 * rw + 1).astype(jnp.float32)                  # (W, 2W)
    rh = jnp.arange(2 * tile_h)[:, None]
    ch = jnp.arange(tile_h)[None, :]
    s0 = (rh == 2 * ch).astype(jnp.float32)                      # (2Th, Th)
    s1 = (rh == 2 * ch + 1).astype(jnp.float32)                  # (2Th, Th)

    out = pl.pallas_call(
        _head_kernel,
        out_shape=jax.ShapeDtypeStruct((N, K, 2 * H, 2 * W), x.dtype),
        grid=(N, n_row_tiles),
        in_specs=[
            pl.BlockSpec(memory_space=pltpu.MemorySpace.SMEM),               # wf
            pl.BlockSpec(memory_space=pltpu.MemorySpace.SMEM),               # bias
            pl.BlockSpec((W, 2 * W), lambda n, i: (0, 0)),                   # p0
            pl.BlockSpec((W, 2 * W), lambda n, i: (0, 0)),                   # p1
            pl.BlockSpec((2 * tile_h, tile_h), lambda n, i: (0, 0)),         # s0
            pl.BlockSpec((2 * tile_h, tile_h), lambda n, i: (0, 0)),         # s1
            pl.BlockSpec((None, C, tile_h, W), lambda n, i: (n, 0, i, 0)),   # x
        ],
        out_specs=pl.BlockSpec((None, K, 2 * tile_h, 2 * W),
                               lambda n, i: (n, 0, i, 0)),
        compiler_params=pltpu.CompilerParams(
            dimension_semantics=("parallel", "parallel")),
    )(wf_flat, b_fused, p0, p1, s0, s1, x)
    return out


def _reference(x, wt, bt, wc, bc):
    """Pure-JAX reference of ConvTranspose2d(k=2,s=2,p=0) + Conv2d(1x1)."""
    N, C, H, W = x.shape
    K = wc.shape[0]
    up = jnp.einsum('nchw,cdab->ndhawb', x, wt).reshape(N, C, 2 * H, 2 * W)
    up = up + bt[None, :, None, None]
    out = jnp.einsum('nchw,kc->nkhw', up, wc.reshape(K, C))
    return out + bc[None, :, None, None]


if __name__ == "__main__":
    key = jax.random.PRNGKey(0)
    N, C, H, W, K = 2, 4, 16, 16, 3

    k0, k1, k2, k3, k4 = jax.random.split(key, 5)
    x = jax.random.normal(k0, (N, C, H, W), dtype=jnp.float32)
    # nn.ConvTranspose2d weight layout: (in_channels, out_channels, kH, kW)
    wt = jax.random.normal(k1, (C, C, 2, 2), dtype=jnp.float32) * 0.1
    bt = jax.random.normal(k2, (C,), dtype=jnp.float32) * 0.1
    # nn.Conv2d 1x1 weight layout: (out_channels=K, in_channels=C, 1, 1)
    wc = jax.random.normal(k3, (K, C, 1, 1), dtype=jnp.float32) * 0.1
    bc = jax.random.normal(k4, (K,), dtype=jnp.float32) * 0.1

    out = jax.block_until_ready(prediction_head(x, wt, bt, wc, bc))
    ref = _reference(x, wt, bt, wc, bc)

    assert out.shape == (N, K, 2 * H, 2 * W), out.shape
    err = float(jnp.max(jnp.abs(out - ref)))
    assert jnp.allclose(out, ref, atol=1e-4, rtol=1e-4), err
    print("KERNEL_OK")
</pallas_src>

<mosaic_0001>
module attributes {stable_mosaic.version = 11 : i64} {
  func.func @_head_kernel(%arg0: i32, %arg1: i32, %arg2: memref<48xf32, #tpu.memory_space<smem>>, %arg3: memref<3xf32, #tpu.memory_space<smem>>, %arg4: memref<16x32xf32, #tpu.memory_space<vmem>>, %arg5: memref<16x32xf32, #tpu.memory_space<vmem>>, %arg6: memref<16x8xf32, #tpu.memory_space<vmem>>, %arg7: memref<16x8xf32, #tpu.memory_space<vmem>>, %arg8: memref<1x4x8x16xf32, #tpu.memory_space<vmem>>, %arg9: memref<1x3x16x32xf32, #tpu.memory_space<vmem>>) attributes {dimension_semantics = [#tpu.dimension_semantics<parallel>, #tpu.dimension_semantics<parallel>], iteration_bounds = array<i64: 2, 2>, scalar_prefetch = 0 : i64, scratch_operands = 0 : i64, tpu.core_type = #tpu.core_type<tc>, window_params = [{transform_indices = @transform_0, window_bounds = array<i64: 48>}, {transform_indices = @transform_1, window_bounds = array<i64: 3>}, {pipeline_mode = #tpu.pipeline_mode<synchronous>, transform_indices = @transform_2, window_bounds = array<i64: 16, 32>}, {pipeline_mode = #tpu.pipeline_mode<synchronous>, transform_indices = @transform_3, window_bounds = array<i64: 16, 32>}, {pipeline_mode = #tpu.pipeline_mode<synchronous>, transform_indices = @transform_4, window_bounds = array<i64: 16, 8>}, {pipeline_mode = #tpu.pipeline_mode<synchronous>, transform_indices = @transform_5, window_bounds = array<i64: 16, 8>}, {transform_indices = @transform_6, window_bounds = array<i64: 1, 4, 8, 16>}, {transform_indices = @transform_7, window_bounds = array<i64: 1, 3, 16, 32>}]} {
    %c0 = arith.constant 0 : index
    %c0_0 = arith.constant 0 : index
    %0 = vector.load %arg4[%c0, %c0_0] : memref<16x32xf32, #tpu.memory_space<vmem>>, vector<16x32xf32>
    %c0_1 = arith.constant 0 : index
    %c0_2 = arith.constant 0 : index
    %1 = vector.load %arg5[%c0_1, %c0_2] : memref<16x32xf32, #tpu.memory_space<vmem>>, vector<16x32xf32>
    %c0_3 = arith.constant 0 : index
    %c0_4 = arith.constant 0 : index
    %2 = vector.load %arg6[%c0_3, %c0_4] : memref<16x8xf32, #tpu.memory_space<vmem>>, vector<16x8xf32>
    %c0_5 = arith.constant 0 : index
    %c0_6 = arith.constant 0 : index
    %3 = vector.load %arg7[%c0_5, %c0_6] : memref<16x8xf32, #tpu.memory_space<vmem>>, vector<16x8xf32>
    %c0_7 = arith.constant 0 : index
    %c0_8 = arith.constant 0 : index
    %c0_9 = arith.constant 0 : index
    %c0_10 = arith.constant 0 : index
    %4 = vector.load %arg8[%c0_7, %c0_8, %c0_9, %c0_10] : memref<1x4x8x16xf32, #tpu.memory_space<vmem>>, vector<1x1x8x16xf32>
    %5 = vector.shape_cast %4 : vector<1x1x8x16xf32> to vector<8x16xf32>
    %c0_11 = arith.constant 0 : index
    %c1 = arith.constant 1 : index
    %c0_12 = arith.constant 0 : index
    %c0_13 = arith.constant 0 : index
    %6 = vector.load %arg8[%c0_11, %c1, %c0_12, %c0_13] : memref<1x4x8x16xf32, #tpu.memory_space<vmem>>, vector<1x1x8x16xf32>
    %7 = vector.shape_cast %6 : vector<1x1x8x16xf32> to vector<8x16xf32>
    %c0_14 = arith.constant 0 : index
    %c2 = arith.constant 2 : index
    %c0_15 = arith.constant 0 : index
    %c0_16 = arith.constant 0 : index
    %8 = vector.load %arg8[%c0_14, %c2, %c0_15, %c0_16] : memref<1x4x8x16xf32, #tpu.memory_space<vmem>>, vector<1x1x8x16xf32>
    %9 = vector.shape_cast %8 : vector<1x1x8x16xf32> to vector<8x16xf32>
    %c0_17 = arith.constant 0 : index
    %c3 = arith.constant 3 : index
    %c0_18 = arith.constant 0 : index
    %c0_19 = arith.constant 0 : index
    %10 = vector.load %arg8[%c0_17, %c3, %c0_18, %c0_19] : memref<1x4x8x16xf32, #tpu.memory_space<vmem>>, vector<1x1x8x16xf32>
    %11 = vector.shape_cast %10 : vector<1x1x8x16xf32> to vector<8x16xf32>
    %c0_20 = arith.constant 0 : index
    %12 = memref.load %arg2[%c0_20] : memref<48xf32, #tpu.memory_space<smem>>
    %c12 = arith.constant 12 : index
    %13 = memref.load %arg2[%c12] : memref<48xf32, #tpu.memory_space<smem>>
    %14 = vector.broadcast %12 : f32 to vector<8x16xf32>
    %15 = arith.mulf %14, %5 : vector<8x16xf32>
    %16 = vector.broadcast %13 : f32 to vector<8x16xf32>
    %17 = arith.mulf %16, %5 : vector<8x16xf32>
    %c1_21 = arith.constant 1 : index
    %18 = memref.load %arg2[%c1_21] : memref<48xf32, #tpu.memory_space<smem>>
    %c13 = arith.constant 13 : index
    %19 = memref.load %arg2[%c13] : memref<48xf32, #tpu.memory_space<smem>>
    %20 = vector.broadcast %18 : f32 to vector<8x16xf32>
    %21 = arith.mulf %20, %7 : vector<8x16xf32>
    %22 = arith.addf %15, %21 : vector<8x16xf32>
    %23 = vector.broadcast %19 : f32 to vector<8x16xf32>
    %24 = arith.mulf %23, %7 : vector<8x16xf32>
    %25 = arith.addf %17, %24 : vector<8x16xf32>
    %c2_22 = arith.constant 2 : index
    %26 = memref.load %arg2[%c2_22] : memref<48xf32, #tpu.memory_space<smem>>
    %c14 = arith.constant 14 : index
    %27 = memref.load %arg2[%c14] : memref<48xf32, #tpu.memory_space<smem>>
    %28 = vector.broadcast %26 : f32 to vector<8x16xf32>
    %29 = arith.mulf %28, %9 : vector<8x16xf32>
    %30 = arith.addf %22, %29 : vector<8x16xf32>
    %31 = vector.broadcast %27 : f32 to vector<8x16xf32>
    %32 = arith.mulf %31, %9 : vector<8x16xf32>
    %33 = arith.addf %25, %32 : vector<8x16xf32>
    %c3_23 = arith.constant 3 : index
    %34 = memref.load %arg2[%c3_23] : memref<48xf32, #tpu.memory_space<smem>>
    %c15 = arith.constant 15 : index
    %35 = memref.load %arg2[%c15] : memref<48xf32, #tpu.memory_space<smem>>
    %36 = vector.broadcast %34 : f32 to vector<8x16xf32>
    %37 = arith.mulf %36, %11 : vector<8x16xf32>
    %38 = arith.addf %30, %37 : vector<8x16xf32>
    %39 = vector.broadcast %35 : f32 to vector<8x16xf32>
    %40 = arith.mulf %39, %11 : vector<8x16xf32>
    %41 = arith.addf %33, %40 : vector<8x16xf32>
    %cst = arith.constant dense<0.000000e+00> : vector<8x32xf32>
    %42 = tpu.matmul %38, %0, %cst {dimension_numbers = #tpu.dot_dimension_numbers<[1], [0], [0], [1], [0, 0, 1, 1], [], []>} : vector<8x16xf32>, vector<16x32xf32>, vector<8x32xf32> -> vector<8x32xf32>
    %cst_24 = arith.constant dense<0.000000e+00> : vector<8x32xf32>
    %43 = tpu.matmul %41, %1, %cst_24 {dimension_numbers = #tpu.dot_dimension_numbers<[1], [0], [0], [1], [0, 0, 1, 1], [], []>} : vector<8x16xf32>, vector<16x32xf32>, vector<8x32xf32> -> vector<8x32xf32>
    %44 = arith.addf %42, %43 : vector<8x32xf32>
    %cst_25 = arith.constant dense<0.000000e+00> : vector<16x32xf32>
    %45 = tpu.matmul %2, %44, %cst_25 {dimension_numbers = #tpu.dot_dimension_numbers<[1], [0], [0], [1], [0, 0, 1, 1], [], []>} : vector<16x8xf32>, vector<8x32xf32>, vector<16x32xf32> -> vector<16x32xf32>
    %c24 = arith.constant 24 : index
    %46 = memref.load %arg2[%c24] : memref<48xf32, #tpu.memory_space<smem>>
    %c36 = arith.constant 36 : index
    %47 = memref.load %arg2[%c36] : memref<48xf32, #tpu.memory_space<smem>>
    %48 = vector.broadcast %46 : f32 to vector<8x16xf32>
    %49 = arith.mulf %48, %5 : vector<8x16xf32>
    %50 = vector.broadcast %47 : f32 to vector<8x16xf32>
    %51 = arith.mulf %50, %5 : vector<8x16xf32>
    %c25 = arith.constant 25 : index
    %52 = memref.load %arg2[%c25] : memref<48xf32, #tpu.memory_space<smem>>
    %c37 = arith.constant 37 : index
    %53 = memref.load %arg2[%c37] : memref<48xf32, #tpu.memory_space<smem>>
    %54 = vector.broadcast %52 : f32 to vector<8x16xf32>
    %55 = arith.mulf %54, %7 : vector<8x16xf32>
    %56 = arith.addf %49, %55 : vector<8x16xf32>
    %57 = vector.broadcast %53 : f32 to vector<8x16xf32>
    %58 = arith.mulf %57, %7 : vector<8x16xf32>
    %59 = arith.addf %51, %58 : vector<8x16xf32>
    %c26 = arith.constant 26 : index
    %60 = memref.load %arg2[%c26] : memref<48xf32, #tpu.memory_space<smem>>
    %c38 = arith.constant 38 : index
    %61 = memref.load %arg2[%c38] : memref<48xf32, #tpu.memory_space<smem>>
    %62 = vector.broadcast %60 : f32 to vector<8x16xf32>
    %63 = arith.mulf %62, %9 : vector<8x16xf32>
    %64 = arith.addf %56, %63 : vector<8x16xf32>
    %65 = vector.broadcast %61 : f32 to vector<8x16xf32>
    %66 = arith.mulf %65, %9 : vector<8x16xf32>
    %67 = arith.addf %59, %66 : vector<8x16xf32>
    %c27 = arith.constant 27 : index
    %68 = memref.load %arg2[%c27] : memref<48xf32, #tpu.memory_space<smem>>
    %c39 = arith.constant 39 : index
    %69 = memref.load %arg2[%c39] : memref<48xf32, #tpu.memory_space<smem>>
    %70 = vector.broadcast %68 : f32 to vector<8x16xf32>
    %71 = arith.mulf %70, %11 : vector<8x16xf32>
    %72 = arith.addf %64, %71 : vector<8x16xf32>
    %73 = vector.broadcast %69 : f32 to vector<8x16xf32>
    %74 = arith.mulf %73, %11 : vector<8x16xf32>
    %75 = arith.addf %67, %74 : vector<8x16xf32>
    %cst_26 = arith.constant dense<0.000000e+00> : vector<8x32xf32>
    %76 = tpu.matmul %72, %0, %cst_26 {dimension_numbers = #tpu.dot_dimension_numbers<[1], [0], [0], [1], [0, 0, 1, 1], [], []>} : vector<8x16xf32>, vector<16x32xf32>, vector<8x32xf32> -> vector<8x32xf32>
    %cst_27 = arith.constant dense<0.000000e+00> : vector<8x32xf32>
    %77 = tpu.matmul %75, %1, %cst_27 {dimension_numbers = #tpu.dot_dimension_numbers<[1], [0], [0], [1], [0, 0, 1, 1], [], []>} : vector<8x16xf32>, vector<16x32xf32>, vector<8x32xf32> -> vector<8x32xf32>
    %78 = arith.addf %76, %77 : vector<8x32xf32>
    %cst_28 = arith.constant dense<0.000000e+00> : vector<16x32xf32>
    %79 = tpu.matmul %3, %78, %cst_28 {dimension_numbers = #tpu.dot_dimension_numbers<[1], [0], [0], [1], [0, 0, 1, 1], [], []>} : vector<16x8xf32>, vector<8x32xf32>, vector<16x32xf32> -> vector<16x32xf32>
    %80 = arith.addf %45, %79 : vector<16x32xf32>
    %c0_29 = arith.constant 0 : index
    %81 = memref.load %arg3[%c0_29] : memref<3xf32, #tpu.memory_space<smem>>
    %82 = vector.broadcast %81 : f32 to vector<16x32xf32>
    %83 = arith.addf %80, %82 : vector<16x32xf32>
    %c0_30 = arith.constant 0 : index
    %c0_31 = arith.constant 0 : index
    %c0_32 = arith.constant 0 : index
    %c0_33 = arith.constant 0 : index
    %84 = vector.load %arg9[%c0_30, %c0_31, %c0_32, %c0_33] : memref<1x3x16x32xf32, #tpu.memory_space<vmem>>, vector<1x1x16x32xf32>
    %85 = vector.shape_cast %84 : vector<1x1x16x32xf32> to vector<16x32xf32>
    %86 = vector.shape_cast %83 : vector<16x32xf32> to vector<1x1x16x32xf32>
    tpu.vector_store %arg9[%c0_30, %c0_31, %c0_32, %c0_33], %86 {strides = array<i32>} : memref<1x3x16x32xf32, #tpu.memory_space<vmem>>, vector<1x1x16x32xf32>,
    %c4 = arith.constant 4 : index
    %87 = memref.load %arg2[%c4] : memref<48xf32, #tpu.memory_space<smem>>
    %c16 = arith.constant 16 : index
    %88 = memref.load %arg2[%c16] : memref<48xf32, #tpu.memory_space<smem>>
    %89 = vector.broadcast %87 : f32 to vector<8x16xf32>
    %90 = arith.mulf %89, %5 : vector<8x16xf32>
    %91 = vector.broadcast %88 : f32 to vector<8x16xf32>
    %92 = arith.mulf %91, %5 : vector<8x16xf32>
    %c5 = arith.constant 5 : index
    %93 = memref.load %arg2[%c5] : memref<48xf32, #tpu.memory_space<smem>>
    %c17 = arith.constant 17 : index
    %94 = memref.load %arg2[%c17] : memref<48xf32, #tpu.memory_space<smem>>
    %95 = vector.broadcast %93 : f32 to vector<8x16xf32>
    %96 = arith.mulf %95, %7 : vector<8x16xf32>
    %97 = arith.addf %90, %96 : vector<8x16xf32>
    %98 = vector.broadcast %94 : f32 to vector<8x16xf32>
    %99 = arith.mulf %98, %7 : vector<8x16xf32>
    %100 = arith.addf %92, %99 : vector<8x16xf32>
    %c6 = arith.constant 6 : index
    %101 = memref.load %arg2[%c6] : memref<48xf32, #tpu.memory_space<smem>>
    %c18 = arith.constant 18 : index
    %102 = memref.load %arg2[%c18] : memref<48xf32, #tpu.memory_space<smem>>
    %103 = vector.broadcast %101 : f32 to vector<8x16xf32>
    %104 = arith.mulf %103, %9 : vector<8x16xf32>
    %105 = arith.addf %97, %104 : vector<8x16xf32>
    %106 = vector.broadcast %102 : f32 to vector<8x16xf32>
    %107 = arith.mulf %106, %9 : vector<8x16xf32>
    %108 = arith.addf %100, %107 : vector<8x16xf32>
    %c7 = arith.constant 7 : index
    %109 = memref.load %arg2[%c7] : memref<48xf32, #tpu.memory_space<smem>>
    %c19 = arith.constant 19 : index
    %110 = memref.load %arg2[%c19] : memref<48xf32, #tpu.memory_space<smem>>
    %111 = vector.broadcast %109 : f32 to vector<8x16xf32>
    %112 = arith.mulf %111, %11 : vector<8x16xf32>
    %113 = arith.addf %105, %112 : vector<8x16xf32>
    %114 = vector.broadcast %110 : f32 to vector<8x16xf32>
    %115 = arith.mulf %114, %11 : vector<8x16xf32>
    %116 = arith.addf %108, %115 : vector<8x16xf32>
    %cst_34 = arith.constant dense<0.000000e+00> : vector<8x32xf32>
    %117 = tpu.matmul %113, %0, %cst_34 {dimension_numbers = #tpu.dot_dimension_numbers<[1], [0], [0], [1], [0, 0, 1, 1], [], []>} : vector<8x16xf32>, vector<16x32xf32>, vector<8x32xf32> -> vector<8x32xf32>
    %cst_35 = arith.constant dense<0.000000e+00> : vector<8x32xf32>
    %118 = tpu.matmul %116, %1, %cst_35 {dimension_numbers = #tpu.dot_dimension_numbers<[1], [0], [0], [1], [0, 0, 1, 1], [], []>} : vector<8x16xf32>, vector<16x32xf32>, vector<8x32xf32> -> vector<8x32xf32>
    %119 = arith.addf %117, %118 : vector<8x32xf32>
    %cst_36 = arith.constant dense<0.000000e+00> : vector<16x32xf32>
    %120 = tpu.matmul %2, %119, %cst_36 {dimension_numbers = #tpu.dot_dimension_numbers<[1], [0], [0], [1], [0, 0, 1, 1], [], []>} : vector<16x8xf32>, vector<8x32xf32>, vector<16x32xf32> -> vector<16x32xf32>
    %c28 = arith.constant 28 : index
    %121 = memref.load %arg2[%c28] : memref<48xf32, #tpu.memory_space<smem>>
    %c40 = arith.constant 40 : index
    %122 = memref.load %arg2[%c40] : memref<48xf32, #tpu.memory_space<smem>>
    %123 = vector.broadcast %121 : f32 to vector<8x16xf32>
    %124 = arith.mulf %123, %5 : vector<8x16xf32>
    %125 = vector.broadcast %122 : f32 to vector<8x16xf32>
    %126 = arith.mulf %125, %5 : vector<8x16xf32>
    %c29 = arith.constant 29 : index
    %127 = memref.load %arg2[%c29] : memref<48xf32, #tpu.memory_space<smem>>
    %c41 = arith.constant 41 : index
    %128 = memref.load %arg2[%c41] : memref<48xf32, #tpu.memory_space<smem>>
    %129 = vector.broadcast %127 : f32 to vector<8x16xf32>
    %130 = arith.mulf %129, %7 : vector<8x16xf32>
    %131 = arith.addf %124, %130 : vector<8x16xf32>
    %132 = vector.broadcast %128 : f32 to vector<8x16xf32>
    %133 = arith.mulf %132, %7 : vector<8x16xf32>
    %134 = arith.addf %126, %133 : vector<8x16xf32>
    %c30 = arith.constant 30 : index
    %135 = memref.load %arg2[%c30] : memref<48xf32, #tpu.memory_space<smem>>
    %c42 = arith.constant 42 : index
    %136 = memref.load %arg2[%c42] : memref<48xf32, #tpu.memory_space<smem>>
    %137 = vector.broadcast %135 : f32 to vector<8x16xf32>
    %138 = arith.mulf %137, %9 : vector<8x16xf32>
    %139 = arith.addf %131, %138 : vector<8x16xf32>
    %140 = vector.broadcast %136 : f32 to vector<8x16xf32>
    %141 = arith.mulf %140, %9 : vector<8x16xf32>
    %142 = arith.addf %134, %141 : vector<8x16xf32>
    %c31 = arith.constant 31 : index
    %143 = memref.load %arg2[%c31] : memref<48xf32, #tpu.memory_space<smem>>
    %c43 = arith.constant 43 : index
    %144 = memref.load %arg2[%c43] : memref<48xf32, #tpu.memory_space<smem>>
    %145 = vector.broadcast %143 : f32 to vector<8x16xf32>
    %146 = arith.mulf %145, %11 : vector<8x16xf32>
    %147 = arith.addf %139, %146 : vector<8x16xf32>
    %148 = vector.broadcast %144 : f32 to vector<8x16xf32>
    %149 = arith.mulf %148, %11 : vector<8x16xf32>
    %150 = arith.addf %142, %149 : vector<8x16xf32>
    %cst_37 = arith.constant dense<0.000000e+00> : vector<8x32xf32>
    %151 = tpu.matmul %147, %0, %cst_37 {dimension_numbers = #tpu.dot_dimension_numbers<[1], [0], [0], [1], [0, 0, 1, 1], [], []>} : vector<8x16xf32>, vector<16x32xf32>, vector<8x32xf32> -> vector<8x32xf32>
    %cst_38 = arith.constant dense<0.000000e+00> : vector<8x32xf32>
    %152 = tpu.matmul %150, %1, %cst_38 {dimension_numbers = #tpu.dot_dimension_numbers<[1], [0], [0], [1], [0, 0, 1, 1], [], []>} : vector<8x16xf32>, vector<16x32xf32>, vector<8x32xf32> -> vector<8x32xf32>
    %153 = arith.addf %151, %152 : vector<8x32xf32>
    %cst_39 = arith.constant dense<0.000000e+00> : vector<16x32xf32>
    %154 = tpu.matmul %3, %153, %cst_39 {dimension_numbers = #tpu.dot_dimension_numbers<[1], [0], [0], [1], [0, 0, 1, 1], [], []>} : vector<16x8xf32>, vector<8x32xf32>, vector<16x32xf32> -> vector<16x32xf32>
    %155 = arith.addf %120, %154 : vector<16x32xf32>
    %c1_40 = arith.constant 1 : index
    %156 = memref.load %arg3[%c1_40] : memref<3xf32, #tpu.memory_space<smem>>
    %157 = vector.broadcast %156 : f32 to vector<16x32xf32>
    %158 = arith.addf %155, %157 : vector<16x32xf32>
    %c0_41 = arith.constant 0 : index
    %c1_42 = arith.constant 1 : index
    %c0_43 = arith.constant 0 : index
    %c0_44 = arith.constant 0 : index
    %159 = vector.load %arg9[%c0_41, %c1_42, %c0_43, %c0_44] : memref<1x3x16x32xf32, #tpu.memory_space<vmem>>, vector<1x1x16x32xf32>
    %160 = vector.shape_cast %159 : vector<1x1x16x32xf32> to vector<16x32xf32>
    %161 = vector.shape_cast %158 : vector<16x32xf32> to vector<1x1x16x32xf32>
    tpu.vector_store %arg9[%c0_41, %c1_42, %c0_43, %c0_44], %161 {strides = array<i32>} : memref<1x3x16x32xf32, #tpu.memory_space<vmem>>, vector<1x1x16x32xf32>,
    %c8 = arith.constant 8 : index
    %162 = memref.load %arg2[%c8] : memref<48xf32, #tpu.memory_space<smem>>
    %c20 = arith.constant 20 : index
    %163 = memref.load %arg2[%c20] : memref<48xf32, #tpu.memory_space<smem>>
    %164 = vector.broadcast %162 : f32 to vector<8x16xf32>
    %165 = arith.mulf %164, %5 : vector<8x16xf32>
    %166 = vector.broadcast %163 : f32 to vector<8x16xf32>
    %167 = arith.mulf %166, %5 : vector<8x16xf32>
    %c9 = arith.constant 9 : index
    %168 = memref.load %arg2[%c9] : memref<48xf32, #tpu.memory_space<smem>>
    %c21 = arith.constant 21 : index
    %169 = memref.load %arg2[%c21] : memref<48xf32, #tpu.memory_space<smem>>
    %170 = vector.broadcast %168 : f32 to vector<8x16xf32>
    %171 = arith.mulf %170, %7 : vector<8x16xf32>
    %172 = arith.addf %165, %171 : vector<8x16xf32>
    %173 = vector.broadcast %169 : f32 to vector<8x16xf32>
    %174 = arith.mulf %173, %7 : vector<8x16xf32>
    %175 = arith.addf %167, %174 : vector<8x16xf32>
    %c10 = arith.constant 10 : index
    %176 = memref.load %arg2[%c10] : memref<48xf32, #tpu.memory_space<smem>>
    %c22 = arith.constant 22 : index
    %177 = memref.load %arg2[%c22] : memref<48xf32, #tpu.memory_space<smem>>
    %178 = vector.broadcast %176 : f32 to vector<8x16xf32>
    %179 = arith.mulf %178, %9 : vector<8x16xf32>
    %180 = arith.addf %172, %179 : vector<8x16xf32>
    %181 = vector.broadcast %177 : f32 to vector<8x16xf32>
    %182 = arith.mulf %181, %9 : vector<8x16xf32>
    %183 = arith.addf %175, %182 : vector<8x16xf32>
    %c11 = arith.constant 11 : index
    %184 = memref.load %arg2[%c11] : memref<48xf32, #tpu.memory_space<smem>>
    %c23 = arith.constant 23 : index
    %185 = memref.load %arg2[%c23] : memref<48xf32, #tpu.memory_space<smem>>
    %186 = vector.broadcast %184 : f32 to vector<8x16xf32>
    %187 = arith.mulf %186, %11 : vector<8x16xf32>
    %188 = arith.addf %180, %187 : vector<8x16xf32>
    %189 = vector.broadcast %185 : f32 to vector<8x16xf32>
    %190 = arith.mulf %189, %11 : vector<8x16xf32>
    %191 = arith.addf %183, %190 : vector<8x16xf32>
    %cst_45 = arith.constant dense<0.000000e+00> : vector<8x32xf32>
    %192 = tpu.matmul %188, %0, %cst_45 {dimension_numbers = #tpu.dot_dimension_numbers<[1], [0], [0], [1], [0, 0, 1, 1], [], []>} : vector<8x16xf32>, vector<16x32xf32>, vector<8x32xf32> -> vector<8x32xf32>
    %cst_46 = arith.constant dense<0.000000e+00> : vector<8x32xf32>
    %193 = tpu.matmul %191, %1, %cst_46 {dimension_numbers = #tpu.dot_dimension_numbers<[1], [0], [0], [1], [0, 0, 1, 1], [], []>} : vector<8x16xf32>, vector<16x32xf32>, vector<8x32xf32> -> vector<8x32xf32>
    %194 = arith.addf %192, %193 : vector<8x32xf32>
    %cst_47 = arith.constant dense<0.000000e+00> : vector<16x32xf32>
    %195 = tpu.matmul %2, %194, %cst_47 {dimension_numbers = #tpu.dot_dimension_numbers<[1], [0], [0], [1], [0, 0, 1, 1], [], []>} : vector<16x8xf32>, vector<8x32xf32>, vector<16x32xf32> -> vector<16x32xf32>
    %c32 = arith.constant 32 : index
    %196 = memref.load %arg2[%c32] : memref<48xf32, #tpu.memory_space<smem>>
    %c44 = arith.constant 44 : index
    %197 = memref.load %arg2[%c44] : memref<48xf32, #tpu.memory_space<smem>>
    %198 = vector.broadcast %196 : f32 to vector<8x16xf32>
    %199 = arith.mulf %198, %5 : vector<8x16xf32>
    %200 = vector.broadcast %197 : f32 to vector<8x16xf32>
    %201 = arith.mulf %200, %5 : vector<8x16xf32>
    %c33 = arith.constant 33 : index
    %202 = memref.load %arg2[%c33] : memref<48xf32, #tpu.memory_space<smem>>
    %c45 = arith.constant 45 : index
    %203 = memref.load %arg2[%c45] : memref<48xf32, #tpu.memory_space<smem>>
    %204 = vector.broadcast %202 : f32 to vector<8x16xf32>
    %205 = arith.mulf %204, %7 : vector<8x16xf32>
    %206 = arith.addf %199, %205 : vector<8x16xf32>
    %207 = vector.broadcast %203 : f32 to vector<8x16xf32>
    %208 = arith.mulf %207, %7 : vector<8x16xf32>
    %209 = arith.addf %201, %208 : vector<8x16xf32>
    %c34 = arith.constant 34 : index
    %210 = memref.load %arg2[%c34] : memref<48xf32, #tpu.memory_space<smem>>
    %c46 = arith.constant 46 : index
    %211 = memref.load %arg2[%c46] : memref<48xf32, #tpu.memory_space<smem>>
    %212 = vector.broadcast %210 : f32 to vector<8x16xf32>
    %213 = arith.mulf %212, %9 : vector<8x16xf32>
    %214 = arith.addf %206, %213 : vector<8x16xf32>
    %215 = vector.broadcast %211 : f32 to vector<8x16xf32>
    %216 = arith.mulf %215, %9 : vector<8x16xf32>
    %217 = arith.addf %209, %216 : vector<8x16xf32>
    %c35 = arith.constant 35 : index
    %218 = memref.load %arg2[%c35] : memref<48xf32, #tpu.memory_space<smem>>
    %c47 = arith.constant 47 : index
    %219 = memref.load %arg2[%c47] : memref<48xf32, #tpu.memory_space<smem>>
    %220 = vector.broadcast %218 : f32 to vector<8x16xf32>
    %221 = arith.mulf %220, %11 : vector<8x16xf32>
    %222 = arith.addf %214, %221 : vector<8x16xf32>
    %223 = vector.broadcast %219 : f32 to vector<8x16xf32>
    %224 = arith.mulf %223, %11 : vector<8x16xf32>
    %225 = arith.addf %217, %224 : vector<8x16xf32>
    %cst_48 = arith.constant dense<0.000000e+00> : vector<8x32xf32>
    %226 = tpu.matmul %222, %0, %cst_48 {dimension_numbers = #tpu.dot_dimension_numbers<[1], [0], [0], [1], [0, 0, 1, 1], [], []>} : vector<8x16xf32>, vector<16x32xf32>, vector<8x32xf32> -> vector<8x32xf32>
    %cst_49 = arith.constant dense<0.000000e+00> : vector<8x32xf32>
    %227 = tpu.matmul %225, %1, %cst_49 {dimension_numbers = #tpu.dot_dimension_numbers<[1], [0], [0], [1], [0, 0, 1, 1], [], []>} : vector<8x16xf32>, vector<16x32xf32>, vector<8x32xf32> -> vector<8x32xf32>
    %228 = arith.addf %226, %227 : vector<8x32xf32>
    %cst_50 = arith.constant dense<0.000000e+00> : vector<16x32xf32>
    %229 = tpu.matmul %3, %228, %cst_50 {dimension_numbers = #tpu.dot_dimension_numbers<[1], [0], [0], [1], [0, 0, 1, 1], [], []>} : vector<16x8xf32>, vector<8x32xf32>, vector<16x32xf32> -> vector<16x32xf32>
    %230 = arith.addf %195, %229 : vector<16x32xf32>
    %c2_51 = arith.constant 2 : index
    %231 = memref.load %arg3[%c2_51] : memref<3xf32, #tpu.memory_space<smem>>
    %232 = vector.broadcast %231 : f32 to vector<16x32xf32>
    %233 = arith.addf %230, %232 : vector<16x32xf32>
    %c0_52 = arith.constant 0 : index
    %c2_53 = arith.constant 2 : index
    %c0_54 = arith.constant 0 : index
    %c0_55 = arith.constant 0 : index
    %234 = vector.load %arg9[%c0_52, %c2_53, %c0_54, %c0_55] : memref<1x3x16x32xf32, #tpu.memory_space<vmem>>, vector<1x1x16x32xf32>
    %235 = vector.shape_cast %234 : vector<1x1x16x32xf32> to vector<16x32xf32>
    %236 = vector.shape_cast %233 : vector<16x32xf32> to vector<1x1x16x32xf32>
    tpu.vector_store %arg9[%c0_52, %c2_53, %c0_54, %c0_55], %236 {strides = array<i32>} : memref<1x3x16x32xf32, #tpu.memory_space<vmem>>, vector<1x1x16x32xf32>,
    return
  }
  func.func @transform_0(%arg0: i32, %arg1: i32) -> i32 {
    %c0_i32 = arith.constant 0 : i32
    %c0_i32_0 = arith.constant 0 : i32
    return %c0_i32 : i32
  }
  func.func @transform_1(%arg0: i32, %arg1: i32) -> i32 {
    %c0_i32 = arith.constant 0 : i32
    %c0_i32_0 = arith.constant 0 : i32
    return %c0_i32 : i32
  }
  func.func @transform_2(%arg0: i32, %arg1: i32) -> (i32, i32) {
    %c0_i32 = arith.constant 0 : i32
    %c0_i32_0 = arith.constant 0 : i32
    %c0_i32_1 = arith.constant 0 : i32
    return %c0_i32, %c0_i32_0 : i32, i32
  }
  func.func @transform_3(%arg0: i32, %arg1: i32) -> (i32, i32) {
    %c0_i32 = arith.constant 0 : i32
    %c0_i32_0 = arith.constant 0 : i32
    %c0_i32_1 = arith.constant 0 : i32
    return %c0_i32, %c0_i32_0 : i32, i32
  }
  func.func @transform_4(%arg0: i32, %arg1: i32) -> (i32, i32) {
    %c0_i32 = arith.constant 0 : i32
    %c0_i32_0 = arith.constant 0 : i32
    %c0_i32_1 = arith.constant 0 : i32
    return %c0_i32, %c0_i32_0 : i32, i32
  }
  func.func @transform_5(%arg0: i32, %arg1: i32) -> (i32, i32) {
    %c0_i32 = arith.constant 0 : i32
    %c0_i32_0 = arith.constant 0 : i32
    %c0_i32_1 = arith.constant 0 : i32
    return %c0_i32, %c0_i32_0 : i32, i32
  }
  func.func @transform_6(%arg0: i32, %arg1: i32) -> (i32, i32, i32, i32) {
    %c0_i32 = arith.constant 0 : i32
    %c0_i32_0 = arith.constant 0 : i32
    %c0_i32_1 = arith.constant 0 : i32
    return %arg0, %c0_i32, %arg1, %c0_i32_0 : i32, i32, i32, i32
  }
  func.func @transform_7(%arg0: i32, %arg1: i32) -> (i32, i32, i32, i32) {
    %c0_i32 = arith.constant 0 : i32
    %c0_i32_0 = arith.constant 0 : i32
    %c0_i32_1 = arith.constant 0 : i32
    return %arg0, %c0_i32, %arg1, %c0_i32_0 : i32, i32, i32, i32
  }
}

</mosaic_0001>

<llo_original>
// kernel: tpu_custom_call.1
$region0: #{tpu_custom_call.1}
  #allocation0 [shape = 'u32[]', space=smem, size = 0x4, offset = 0x4, fixed_abs, tag = 'smem constant byte address 0x4 - core index']
  #allocation1 [shape = 'u32[72,128]{1,0:T(1,128)}', space=vmem, size = 0x9000, scoped, tag = 'internal scratch']
  #allocation10 [shape = 's32[]', space=sflag, size = 0x4, offset = 0, fixed_abs, tag = 'sflag constant byte address 0x0 - dummy sync flag']
  %s0 = inlined_call_operand.vmem [shape: f32[48], index: 0, kind: input, shape index: {}]
  %s1 = inlined_call_operand.vmem [shape: f32[3], index: 1, kind: input, shape index: {}]
  %s2 = inlined_call_operand.vmem [shape: f32[16,32], index: 2, kind: input, shape index: {}]
  %s3 = inlined_call_operand.vmem [shape: f32[16,32], index: 3, kind: input, shape index: {}]
  %s4 = inlined_call_operand.vmem [shape: f32[16,8], index: 4, kind: input, shape index: {}]
  %s5 = inlined_call_operand.vmem [shape: f32[16,8], index: 5, kind: input, shape index: {}]
  %s6 = inlined_call_operand.hbm [shape: f32[2,4,16,16], index: 6, kind: input, shape index: {}]
  %s7 = inlined_call_operand.hbm [shape: f32[2,3,32,32], index: 7, kind: output, shape index: {}]
  %s8 = sld [smem:[#allocation0]]
  $region73: #{tpu_custom_call.1} parent=0
    _
  %s10 = ssub.s32 1, %s8
  %s11 = scalar_select 0, %s10, %s8
  $region1: #{tpu_custom_call.1} parent=0
    #allocation2 [shape = 'u8[512]{0}', space=smem, size = 0x200, scoped, tag = 'input window, operand 0, single buffered']
    #allocation3 [shape = 's32[2]{0}', space=sflag, size = 0x8, scoped, tag = 'scoped memory for tpu_custom_call.1']
    #allocation4 [shape = 's32[2]{0}', space=sflag, size = 0x8, scoped, tag = 'scoped memory for tpu_custom_call.1']
    #allocation5 [shape = 's32[2]{0}', space=sflag, size = 0x8, scoped, tag = 'scoped memory for tpu_custom_call.1']
    #allocation6 [shape = 'u8[512]{0}', space=smem, size = 0x200, scoped, tag = 'input window, operand 1, single buffered']
    #allocation7 [shape = 's32[1]{0}', space=sflag, size = 0x4, scoped, tag = 'scoped memory for tpu_custom_call.1']
    #allocation8 [shape = 'u8[32768]{0}', space=vmem, size = 0x8000, scoped, tag = 'input window, operand 6']
    #allocation9 [shape = 'u8[49152]{0}', space=vmem, size = 0xc000, scoped, tag = 'output window, operand 0']
    %12 = vsyncpa [#allocation5], 0
    %13 = vsyncpa [#allocation7], 0
    %14 = vsyncpa [#allocation3], 0
    %s15 = scalar_lea.sflag [#allocation3], 1
    %16 = vsyncpa %s15, 0
    %17 = vsyncpa [#allocation4], 0
    %s18 = scalar_lea.sflag [#allocation4], 1
    %19 = vsyncpa %s18, 0
    loop: start=0, step=1, limit=6
    $region2: #{tpu_custom_call.1} parent=1 // loop_pre_header
      _
    $region3: #{tpu_custom_call.1} parent=1 // loop_header
      %s21 = sphi 0, %s25
      %p22 = scmp.ge.s32.totalorder %s21, 6
      %s28 = sphi 0, %s40
      %s29 = sphi 0, %s36
      %s30 = sphi 0, %s28
      %s31 = sphi 0, %s29
      %s32 = sphi 0, %s30
      %s33 = sphi 0, %s31
      %s41 = sphi 0, %s41
      %s43 = sphi 0, %s41
      %s44 = sphi 0, %s43
      %s58 = sphi 0, %s44
      %s62 = sphi 0, %s62
      %s64 = sphi 0, %s62
      %s65 = sphi 0, %s64
      %s79 = sphi 0, %s65
      %s83 = sphi 0, %s83
      %s85 = sphi 0, %s83
      %s86 = sphi 0, %s85
      %s100 = sphi 0, %s86
      %s104 = sphi 0, %s104
      %s106 = sphi 0, %s104
      %s107 = sphi 0, %s106
      %s121 = sphi 0, %s107
      %s125 = sphi 0, %s125
      %s127 = sphi 0, %s125
      %s128 = sphi 0, %s127
      %s142 = sphi 0, %s128
      %s146 = sphi 0, %s146
      %s148 = sphi 0, %s146
      %s149 = sphi 0, %s148
      %s163 = sphi 0, %s149
      %s171 = sphi 0, %s173
      %s174 = sphi 0, %s171
      %s175 = sphi 0, %s174
      %s191 = sphi 0, %s175
      %s199 = sphi 0, %s201
      %s202 = sphi 0, %s199
      %s203 = sphi 0, %s202
      %s219 = sphi 0, %s203
    $region4: #{tpu_custom_call.1} parent=1 // loop_header_branch
      %24 = sbr.rel (%p22) target = $region8
    $region5: #{tpu_custom_call.1} parent=1 // loop_body
      %s26 = ssub.s32 %s21, 1
      %s27 = ssub.s32 %s21, 2
      %s34 = sadd.s32 1, %s29
      %p35 = scmp.ge.s32.totalorder %s34, 2
      %s36 = scalar_select %p35, 0, %s34
      %s37 = sadd.s32 1, %s28
      %s38 = scalar_select %p35, %s37, %s28
      %p39 = scmp.ge.s32.totalorder %s38, 2
      %s40 = scalar_select %p39, 0, %s38
      %s42 = sadd.s32 %s41, 1
      %p45 = scmp.eq.s32.totalorder %s21, 3
      %p46 = scmp.ne.s32.totalorder %s41, %s43
      %p47 = scmp.eq.s32.totalorder %s21, 0
      %p48 = por %p46, %p47
      %p49 = scmp.ne.s32.totalorder %s41, %s43
      %p50 = scmp.eq.s32.totalorder %s26, 3
      %p51 = por %p49, %p50
      %p52 = scmp.ne.s32.totalorder %s43, %s44
      %p53 = scmp.eq.s32.totalorder %s26, 0
      %p54 = por %p52, %p53
      %p55 = scmp.ne.s32.totalorder %s43, %s44
      %p56 = scmp.eq.s32.totalorder %s27, 3
      %p57 = por %p55, %p56
      %p59 = scmp.ne.s32.totalorder %s44, %s58
      %p60 = scmp.eq.s32.totalorder %s27, 0
      %p61 = por %p59, %p60
      %s63 = sadd.s32 %s62, 1
      %p66 = scmp.eq.s32.totalorder %s21, 3
      %p67 = scmp.ne.s32.totalorder %s62, %s64
      %p68 = scmp.eq.s32.totalorder %s21, 0
      %p69 = por %p67, %p68
      %p70 = scmp.ne.s32.totalorder %s62, %s64
      %p71 = scmp.eq.s32.totalorder %s26, 3
      %p72 = por %p70, %p71
      %p73 = scmp.ne.s32.totalorder %s64, %s65
      %p74 = scmp.eq.s32.totalorder %s26, 0
      %p75 = por %p73, %p74
      %p76 = scmp.ne.s32.totalorder %s64, %s65
      %p77 = scmp.eq.s32.totalorder %s27, 3
      %p78 = por %p76, %p77
      %p80 = scmp.ne.s32.totalorder %s65, %s79
      %p81 = scmp.eq.s32.totalorder %s27, 0
      %p82 = por %p80, %p81
      %s84 = sadd.s32 %s83, 1
      %p87 = scmp.eq.s32.totalorder %s21, 3
      %p88 = scmp.ne.s32.totalorder %s83, %s85
      %p89 = scmp.eq.s32.totalorder %s21, 0
      %p90 = por %p88, %p89
      %p91 = scmp.ne.s32.totalorder %s83, %s85
      %p92 = scmp.eq.s32.totalorder %s26, 3
      %p93 = por %p91, %p92
      %p94 = scmp.ne.s32.totalorder %s85, %s86
      %p95 = scmp.eq.s32.totalorder %s26, 0
      %p96 = por %p94, %p95
      %p97 = scmp.ne.s32.totalorder %s85, %s86
      %p98 = scmp.eq.s32.totalorder %s27, 3
      %p99 = por %p97, %p98
      %p101 = scmp.ne.s32.totalorder %s86, %s100
      %p102 = scmp.eq.s32.totalorder %s27, 0
      %p103 = por %p101, %p102
      %s105 = sadd.s32 %s104, 1
      %p108 = scmp.eq.s32.totalorder %s21, 3
      %p109 = scmp.ne.s32.totalorder %s104, %s106
      %p110 = scmp.eq.s32.totalorder %s21, 0
      %p111 = por %p109, %p110
      %p112 = scmp.ne.s32.totalorder %s104, %s106
      %p113 = scmp.eq.s32.totalorder %s26, 3
      %p114 = por %p112, %p113
      %p115 = scmp.ne.s32.totalorder %s106, %s107
      %p116 = scmp.eq.s32.totalorder %s26, 0
      %p117 = por %p115, %p116
      %p118 = scmp.ne.s32.totalorder %s106, %s107
      %p119 = scmp.eq.s32.totalorder %s27, 3
      %p120 = por %p118, %p119
      %p122 = scmp.ne.s32.totalorder %s107, %s121
      %p123 = scmp.eq.s32.totalorder %s27, 0
      %p124 = por %p122, %p123
      %s126 = sadd.s32 %s125, 1
      %p129 = scmp.eq.s32.totalorder %s21, 3
      %p130 = scmp.ne.s32.totalorder %s125, %s127
      %p131 = scmp.eq.s32.totalorder %s21, 0
      %p132 = por %p130, %p131
      %p133 = scmp.ne.s32.totalorder %s125, %s127
      %p134 = scmp.eq.s32.totalorder %s26, 3
      %p135 = por %p133, %p134
      %p136 = scmp.ne.s32.totalorder %s127, %s128
      %p137 = scmp.eq.s32.totalorder %s26, 0
      %p138 = por %p136, %p137
      %p139 = scmp.ne.s32.totalorder %s127, %s128
      %p140 = scmp.eq.s32.totalorder %s27, 3
      %p141 = por %p139, %p140
      %p143 = scmp.ne.s32.totalorder %s128, %s142
      %p144 = scmp.eq.s32.totalorder %s27, 0
      %p145 = por %p143, %p144
      %s147 = sadd.s32 %s146, 1
      %p150 = scmp.eq.s32.totalorder %s21, 3
      %p151 = scmp.ne.s32.totalorder %s146, %s148
      %p152 = scmp.eq.s32.totalorder %s21, 0
      %p153 = por %p151, %p152
      %p154 = scmp.ne.s32.totalorder %s146, %s148
      %p155 = scmp.eq.s32.totalorder %s26, 3
      %p156 = por %p154, %p155
      %p157 = scmp.ne.s32.totalorder %s148, %s149
      %p158 = scmp.eq.s32.totalorder %s26, 0
      %p159 = por %p157, %p158
      %p160 = scmp.ne.s32.totalorder %s148, %s149
      %p161 = scmp.eq.s32.totalorder %s27, 3
      %p162 = por %p160, %p161
      %p164 = scmp.ne.s32.totalorder %s149, %s163
      %p165 = scmp.eq.s32.totalorder %s27, 0
      %p166 = por %p164, %p165
      %s167 = ssub.s32 %s28, %s40
      %s168 = ssub.s32 %s29, %s36
      %s169 = sor.u32 %s167, %s168
      %p170 = scmp.eq.s32.totalorder %s169, 0
      %s172 = sadd.s32 %s171, 1
      %s173 = scalar_select %p170, %s171, %s172
      %p176 = pneg %p170
      %p177 = scmp.eq.s32.totalorder %s21, 3
      %p178 = por %p176, %p177
      %p179 = scmp.ne.s32.totalorder %s171, %s174
      %p180 = scmp.eq.s32.totalorder %s21, 0
      %p181 = por %p179, %p180
      %p182 = scmp.ne.s32.totalorder %s171, %s174
      %p183 = scmp.eq.s32.totalorder %s26, 3
      %p184 = por %p182, %p183
      %p185 = scmp.ne.s32.totalorder %s174, %s175
      %p186 = scmp.eq.s32.totalorder %s26, 0
      %p187 = por %p185, %p186
      %p188 = scmp.ne.s32.totalorder %s174, %s175
      %p189 = scmp.eq.s32.totalorder %s27, 3
      %p190 = por %p188, %p189
      %p192 = scmp.ne.s32.totalorder %s175, %s191
      %p193 = scmp.eq.s32.totalorder %s27, 0
      %p194 = por %p192, %p193
      %s195 = ssub.s32 %s28, %s40
      %s196 = ssub.s32 %s29, %s36
      %s197 = sor.u32 %s195, %s196
      %p198 = scmp.eq.s32.totalorder %s197, 0
      %s200 = sadd.s32 %s199, 1
      %s201 = scalar_select %p198, %s199, %s200
      %p204 = pneg %p198
      %p205 = scmp.eq.s32.totalorder %s21, 3
      %p206 = por %p204, %p205
      %p207 = scmp.ne.s32.totalorder %s199, %s202
      %p208 = scmp.eq.s32.totalorder %s21, 0
      %p209 = por %p207, %p208
      %p210 = scmp.ne.s32.totalorder %s199, %s202
      %p211 = scmp.eq.s32.totalorder %s26, 3
      %p212 = por %p210, %p211
      %p213 = scmp.ne.s32.totalorder %s202, %s203
      %p214 = scmp.eq.s32.totalorder %s26, 0
      %p215 = por %p213, %p214
      %p216 = scmp.ne.s32.totalorder %s202, %s203
      %p217 = scmp.eq.s32.totalorder %s27, 3
      %p218 = por %p216, %p217
      %p220 = scmp.ne.s32.totalorder %s203, %s219
      %p221 = scmp.eq.s32.totalorder %s27, 0
      %p222 = por %p220, %p221
      %p223 = scmp.le.s32.totalorder 1, %s21
      %p224 = scmp.lt.s32.totalorder %s21, 5
      %p225 = pnand %p223, %p224
      %p226 = pneg %p225
      // Predicated region
      $region9: #{tpu_custom_call.1} parent=5 // pred_check
        _
      $region10: #{tpu_custom_call.1} parent=5 // pred_check_branch
        %228 = sbr.rel (%p225) target = $region12
      $region11: #{tpu_custom_call.1} parent=5 // pred_region
        %s229 = ssub.s32 %s21, 1
        // Predicated region
        $region13: #{tpu_custom_call.1} parent=11 // pred_check
          %p230 = pneg %p54
        $region14: #{tpu_custom_call.1} parent=11 // pred_check_branch
          %232 = sbr.rel (%p230) target = $region16
        $region15: #{tpu_custom_call.1} parent=11 // pred_region
          %234 = vsyncadd [#allocation5], 0
          %s236 = sshll.u32 %s0, 4
          %s237 = int_to_ptr.vmem [resolvable:$true] %s236
          %239 = dma.vmem_to_smem %s237, 16, [#allocation2], [#allocation5]
        $region16: #{tpu_custom_call.1} parent=11 // pred_fallthru
          _
        // Predicated region
        $region17: #{tpu_custom_call.1} parent=11 // pred_check
          %p240 = pneg %p75
        $region18: #{tpu_custom_call.1} parent=11 // pred_check_branch
          %242 = sbr.rel (%p240) target = $region20
        $region19: #{tpu_custom_call.1} parent=11 // pred_region
          %244 = vsyncadd [#allocation7], 0
          %s246 = sshll.u32 %s1, 4
          %s247 = int_to_ptr.vmem [resolvable:$true] %s246
          %249 = dma.vmem_to_smem %s247, 16, [#allocation6], [#allocation7]
        $region20: #{tpu_custom_call.1} parent=11 // pred_fallthru
          _
        // Predicated region
        $region21: #{tpu_custom_call.1} parent=11 // pred_check
          %p250 = pneg %p96
        $region22: #{tpu_custom_call.1} parent=11 // pred_check_branch
          %252 = sbr.rel (%p250) target = $region24
        $region23: #{tpu_custom_call.1} parent=11 // pred_region
          _
        $region24: #{tpu_custom_call.1} parent=11 // pred_fallthru
          _
        // Predicated region
        $region25: #{tpu_custom_call.1} parent=11 // pred_check
          %p253 = pneg %p117
        $region26: #{tpu_custom_call.1} parent=11 // pred_check_branch
          %255 = sbr.rel (%p253) target = $region28
        $region27: #{tpu_custom_call.1} parent=11 // pred_region
          _
        $region28: #{tpu_custom_call.1} parent=11 // pred_fallthru
          _
        // Predicated region
        $region29: #{tpu_custom_call.1} parent=11 // pred_check
          %p256 = pneg %p138
        $region30: #{tpu_custom_call.1} parent=11 // pred_check_branch
          %258 = sbr.rel (%p256) target = $region32
        $region31: #{tpu_custom_call.1} parent=11 // pred_region
          _
        $region32: #{tpu_custom_call.1} parent=11 // pred_fallthru
          _
        // Predicated region
        $region33: #{tpu_custom_call.1} parent=11 // pred_check
          %p259 = pneg %p159
        $region34: #{tpu_custom_call.1} parent=11 // pred_check_branch
          %261 = sbr.rel (%p259) target = $region36
        $region35: #{tpu_custom_call.1} parent=11 // pred_region
          _
        $region36: #{tpu_custom_call.1} parent=11 // pred_fallthru
          _
      $region12: #{tpu_custom_call.1} parent=5 // pred_fallthru
        _
      %p262 = scmp.lt.s32.totalorder %s21, 4
      // Predicated region
      $region37: #{tpu_custom_call.1} parent=5 // pred_check
        %p263 = pneg %p262
      $region38: #{tpu_custom_call.1} parent=5 // pred_check_branch
        %265 = sbr.rel (%p263) target = $region40
      $region39: #{tpu_custom_call.1} parent=5 // pred_region
        // Predicated region
        $region41: #{tpu_custom_call.1} parent=39 // pred_check
          %p266 = pneg %p181
        $region42: #{tpu_custom_call.1} parent=39 // pred_check_branch
          %268 = sbr.rel (%p266) target = $region44
        $region43: #{tpu_custom_call.1} parent=39 // pred_region
          %s269 = sand.u32 %s171, 1
          %s270 = scalar_lea.sflag [#allocation3], %s269
          %s271 = sand.u32 %s171, 1
          %s272 = smul.addr %s271, 32
          %s273 = scalar_lea.vmem [#allocation8], %s272
          %275 = vsyncadd %s270, 0
          %s276 = smul.addr %s28, 8
          %s277 = sadd.s32 %s29, %s276
          %s278 = smul.addr %s277, 8
          %s279 = scalar_lea.hbm %s6, %s278
          %s280 = sshll.u32 %s279, 4
          %s281 = int_to_ptr.hbm [resolvable:$true] %s280
          %s282 = sshll.u32 %s273, 4
          %s283 = int_to_ptr.vmem [resolvable:$true] %s282
          %288 = dma.hbm_to_vmem [thread:$0]  %s281, 512, %s283, %s270, 256, 128, 8
        $region44: #{tpu_custom_call.1} parent=39 // pred_fallthru
          _
      $region40: #{tpu_custom_call.1} parent=5 // pred_fallthru
        _
      %p289 = scmp.le.s32.totalorder 1, %s21
      %p290 = scmp.lt.s32.totalorder %s21, 5
      %p291 = pnand %p289, %p290
      %p292 = pneg %p291
      // Predicated region
      $region45: #{tpu_custom_call.1} parent=5 // pred_check
        _
      $region46: #{tpu_custom_call.1} parent=5 // pred_check_branch
        %294 = sbr.rel (%p291) target = $region48
      $region47: #{tpu_custom_call.1} parent=5 // pred_region
        %s295 = ssub.s32 %s21, 1
        // Predicated region
        $region49: #{tpu_custom_call.1} parent=47 // pred_check
          %p296 = pneg %p54
        $region50: #{tpu_custom_call.1} parent=47 // pred_check_branch
          %298 = sbr.rel (%p296) target = $region52
        $region51: #{tpu_custom_call.1} parent=47 // pred_region
          %300 = dma.done [#allocation5], 16
        $region52: #{tpu_custom_call.1} parent=47 // pred_fallthru
          _
        // Predicated region
        $region53: #{tpu_custom_call.1} parent=47 // pred_check
          %p301 = pneg %p75
        $region54: #{tpu_custom_call.1} parent=47 // pred_check_branch
          %303 = sbr.rel (%p301) target = $region56
        $region55: #{tpu_custom_call.1} parent=47 // pred_region
          %305 = dma.done [#allocation7], 16
        $region56: #{tpu_custom_call.1} parent=47 // pred_fallthru
          _
        %s306 = sand.u32 %s174, 1
        %s307 = scalar_lea.sflag [#allocation3], %s306
        %s308 = sand.u32 %s174, 1
        %s309 = smul.addr %s308, 32
        %s310 = scalar_lea.vmem [#allocation8], %s309
        // Predicated region
        $region57: #{tpu_custom_call.1} parent=47 // pred_check
          %p311 = pneg %p187
        $region58: #{tpu_custom_call.1} parent=47 // pred_check_branch
          %313 = sbr.rel (%p311) target = $region60
        $region59: #{tpu_custom_call.1} parent=47 // pred_region
          %315 = dma.done %s307, 512
        $region60: #{tpu_custom_call.1} parent=47 // pred_fallthru
          _
        %316 = sfence
        %p317 = pneg %p54
        %p318 = pneg %p51
        %p319 = pneg %p75
        %p320 = pneg %p72
        %p321 = pneg %p96
        %p322 = pneg %p93
        %p323 = pneg %p117
        %p324 = pneg %p114
        %p325 = pneg %p138
        %p326 = pneg %p135
        %p327 = pneg %p159
        %p328 = pneg %p156
        %s329 = sand.u32 %s174, 1
        %s330 = scalar_lea.sflag [#allocation3], %s329
        %s331 = sand.u32 %s174, 1
        %s332 = smul.addr %s331, 32
        %s333 = scalar_lea.vmem [#allocation8], %s332
        %p334 = pneg %p187
        %p335 = pneg %p184
        %p336 = pneg %p215
        %p337 = pneg %p212
        %s338 = sand.u32 %s202, 1
        %s339 = scalar_lea.sflag [#allocation4], %s338
        %s340 = sand.u32 %s202, 1
        %s341 = smul.addr %s340, 48
        %s342 = scalar_lea.vmem [#allocation9], %s341
        %s343 = smul.u32 2, %s31
        %v344 = vld [vmem:[%s2] sm:$0xff]
        %v345 = vld [vmem:[%s2 + $0x8] sm:$0xff]
        %v346 = vld [vmem:[%s3] sm:$0xff]
        %v347 = vld [vmem:[%s3 + $0x8] sm:$0xff]
        %v348 = vld [vmem:[%s4] sm:$0xff]
        %v349 = vld [vmem:[%s4 + $0x8] sm:$0xff]
        %v350 = vld [vmem:[%s5] sm:$0xff]
        %v351 = vld [vmem:[%s5 + $0x8] sm:$0xff]
        %v352 = vld [vmem:[%s310] sm:$0xff]
        %s353 = scalar_lea.vmem %s310, 8 [#allocation8]
        %v354 = vld [vmem:[%s353] sm:$0xff]
        %s355 = scalar_lea.vmem %s310, 16 [#allocation8]
        %v356 = vld [vmem:[%s355] sm:$0xff]
        %s357 = scalar_lea.vmem %s310, 24 [#allocation8]
        %v358 = vld [vmem:[%s357] sm:$0xff]
        %s359 = sld [smem:[#allocation2]]
        %s360 = sld [smem:[#allocation2 + $0xc]]
        %v361 = vstv %s359
        %v362 = vmul.f32 %v361, %v352
        %v363 = vstv %s360
        %v364 = vmul.f32 %v363, %v352
        %s365 = sld [smem:[#allocation2 + $0x1]]
        %s366 = sld [smem:[#allocation2 + $0xd]]
        %v367 = vstv %s365
        %v368 = vmul.f32 %v367, %v354
        %v369 = vadd.f32 %v362, %v368
        %v370 = vstv %s366
        %v371 = vmul.f32 %v370, %v354
        %v372 = vadd.f32 %v364, %v371
        %s373 = sld [smem:[#allocation2 + $0x2]]
        %s374 = sld [smem:[#allocation2 + $0xe]]
        %v375 = vstv %s373
        %v376 = vmul.f32 %v375, %v356
        %v377 = vadd.f32 %v369, %v376
        %v378 = vstv %s374
        %v379 = vmul.f32 %v378, %v356
        %v380 = vadd.f32 %v372, %v379
        %s381 = sld [smem:[#allocation2 + $0x3]]
        %s382 = sld [smem:[#allocation2 + $0xf]]
        %v383 = vstv %s381
        %v384 = vmul.f32 %v383, %v358
        %v385 = vadd.f32 %v377, %v384
        %v386 = vstv %s382
        %v387 = vmul.f32 %v386, %v358
        %v388 = vadd.f32 %v380, %v387
        %vm389 = vcmask 130048
        %v391 = vsel %vm389, %v388, 0
        %393 = vmatpush.msra.mxu0 0.0
        %394 = vmatpush.msra.mxu0 0.0
        %395 = vmatpush.msra.mxu0 0.0
        %396 = vmatpush.msra.mxu0 0.0
        %397 = vmatpush.msra.mxu0 0.0
        %398 = vmatpush.msra.mxu0 0.0
        %399 = vmatpush.msra.mxu0 0.0
        %400 = vmatpush.msra.mxu0 0.0
        %401 = vmatpush.msra.mxu0 0.0
        %402 = vmatpush.msra.mxu0 0.0
        %403 = vmatpush.msra.mxu0 0.0
        %404 = vmatpush.msra.mxu0 0.0
        %405 = vmatpush.msra.mxu0 0.0
        %406 = vmatpush.msra.mxu0 0.0
        %407 = vmatpush.msra.mxu0 %v347
        %408 = vmatpush.msra.mxu0 %v346
        %409 = vmatmul.f32.gmra.mxu0 %v391
        %v410 = vpop.f32.mrf.mxu0
        %v411 = vadd.f32 0.0, %v410
        %412 = vdwg.mxu0
        %v414 = vsel %vm389, %v385, 0
        %416 = vmatpush.msra.mxu0 0.0
        %417 = vmatpush.msra.mxu0 0.0
        %418 = vmatpush.msra.mxu0 0.0
        %419 = vmatpush.msra.mxu0 0.0
        %420 = vmatpush.msra.mxu0 0.0
        %421 = vmatpush.msra.mxu0 0.0
        %422 = vmatpush.msra.mxu0 0.0
        %423 = vmatpush.msra.mxu0 0.0
        %424 = vmatpush.msra.mxu0 0.0
        %425 = vmatpush.msra.mxu0 0.0
        %426 = vmatpush.msra.mxu0 0.0
        %427 = vmatpush.msra.mxu0 0.0
        %428 = vmatpush.msra.mxu0 0.0
        %429 = vmatpush.msra.mxu0 0.0
        %430 = vmatpush.msra.mxu0 %v345
        %431 = vmatpush.msra.mxu0 %v344
        %432 = vmatmul.f32.gmra.mxu0 %v414
        %v433 = vpop.f32.mrf.mxu0
        %v434 = vadd.f32 %v411, %v433
        %435 = vdwg.mxu0
        %s436 = sld [smem:[#allocation2 + $0x18]]
        %s437 = sld [smem:[#allocation2 + $0x24]]
        %v438 = vstv %s436
        %v439 = vmul.f32 %v438, %v352
        %v440 = vstv %s437
        %v441 = vmul.f32 %v440, %v352
        %s442 = sld [smem:[#allocation2 + $0x19]]
        %s443 = sld [smem:[#allocation2 + $0x25]]
        %v444 = vstv %s442
        %v445 = vmul.f32 %v444, %v354
        %v446 = vadd.f32 %v439, %v445
        %v447 = vstv %s443
        %v448 = vmul.f32 %v447, %v354
        %v449 = vadd.f32 %v441, %v448
        %s450 = sld [smem:[#allocation2 + $0x1a]]
        %s451 = sld [smem:[#allocation2 + $0x26]]
        %v452 = vstv %s450
        %v453 = vmul.f32 %v452, %v356
        %v454 = vadd.f32 %v446, %v453
        %v455 = vstv %s451
        %v456 = vmul.f32 %v455, %v356
        %v457 = vadd.f32 %v449, %v456
        %s458 = sld [smem:[#allocation2 + $0x1b]]
        %s459 = sld [smem:[#allocation2 + $0x27]]
        %v460 = vstv %s458
        %v461 = vmul.f32 %v460, %v358
        %v462 = vadd.f32 %v454, %v461
        %v463 = vstv %s459
        %v464 = vmul.f32 %v463, %v358
        %v465 = vadd.f32 %v457, %v464
        %v467 = vsel %vm389, %v465, 0
        %469 = vmatpush.msra.mxu0 0.0
        %470 = vmatpush.msra.mxu0 0.0
        %471 = vmatpush.msra.mxu0 0.0
        %472 = vmatpush.msra.mxu0 0.0
        %473 = vmatpush.msra.mxu0 0.0
        %474 = vmatpush.msra.mxu0 0.0
        %475 = vmatpush.msra.mxu0 0.0
        %476 = vmatpush.msra.mxu0 0.0
        %477 = vmatpush.msra.mxu0 0.0
        %478 = vmatpush.msra.mxu0 0.0
        %479 = vmatpush.msra.mxu0 0.0
        %480 = vmatpush.msra.mxu0 0.0
        %481 = vmatpush.msra.mxu0 0.0
        %482 = vmatpush.msra.mxu0 0.0
        %483 = vmatpush.msra.mxu0 %v347
        %484 = vmatpush.msra.mxu0 %v346
        %485 = vmatmul.f32.gmra.mxu0 %v467
        %v486 = vpop.f32.mrf.mxu0
        %v487 = vadd.f32 0.0, %v486
        %488 = vdwg.mxu0
        %v490 = vsel %vm389, %v462, 0
        %492 = vmatpush.msra.mxu0 0.0
        %493 = vmatpush.msra.mxu0 0.0
        %494 = vmatpush.msra.mxu0 0.0
        %495 = vmatpush.msra.mxu0 0.0
        %496 = vmatpush.msra.mxu0 0.0
        %497 = vmatpush.msra.mxu0 0.0
        %498 = vmatpush.msra.mxu0 0.0
        %499 = vmatpush.msra.mxu0 0.0
        %500 = vmatpush.msra.mxu0 0.0
        %501 = vmatpush.msra.mxu0 0.0
        %502 = vmatpush.msra.mxu0 0.0
        %503 = vmatpush.msra.mxu0 0.0
        %504 = vmatpush.msra.mxu0 0.0
        %505 = vmatpush.msra.mxu0 0.0
        %506 = vmatpush.msra.mxu0 %v345
        %507 = vmatpush.msra.mxu0 %v344
        %508 = vmatmul.f32.gmra.mxu0 %v490
        %v509 = vpop.f32.mrf.mxu0
        %v510 = vadd.f32 %v487, %v509
        %511 = vdwg.mxu0
        %vm512 = vcmask 64512
        %v514 = vsel %vm512, %v350, 0
        %v517 = vsel %vm512, %v351, 0
        %519 = vmatpush.msra.mxu0 0.0
        %520 = vmatpush.msra.mxu0 0.0
        %521 = vmatpush.msra.mxu0 0.0
        %522 = vmatpush.msra.mxu0 0.0
        %523 = vmatpush.msra.mxu0 0.0
        %524 = vmatpush.msra.mxu0 0.0
        %525 = vmatpush.msra.mxu0 0.0
        %526 = vmatpush.msra.mxu0 0.0
        %527 = vmatpush.msra.mxu0 0.0
        %528 = vmatpush.msra.mxu0 0.0
        %529 = vmatpush.msra.mxu0 0.0
        %530 = vmatpush.msra.mxu0 0.0
        %531 = vmatpush.msra.mxu0 0.0
        %532 = vmatpush.msra.mxu0 0.0
        %533 = vmatpush.msra.mxu0 0.0
        %534 = vmatpush.msra.mxu0 %v510
        %535 = vmatmul.f32.gmra.mxu0 %v514
        %v536 = vpop.f32.mrf.mxu0
        %v537 = vadd.f32 0.0, %v536
        %538 = vmatmul.f32.gmra.mxu0 %v517
        %v539 = vpop.f32.mrf.mxu0
        %v540 = vadd.f32 0.0, %v539
        %541 = vdwg.mxu0
        %v543 = vsel %vm512, %v348, 0
        %v546 = vsel %vm512, %v349, 0
        %548 = vmatpush.msra.mxu0 0.0
        %549 = vmatpush.msra.mxu0 0.0
        %550 = vmatpush.msra.mxu0 0.0
        %551 = vmatpush.msra.mxu0 0.0
        %552 = vmatpush.msra.mxu0 0.0
        %553 = vmatpush.msra.mxu0 0.0
        %554 = vmatpush.msra.mxu0 0.0
        %555 = vmatpush.msra.mxu0 0.0
        %556 = vmatpush.msra.mxu0 0.0
        %557 = vmatpush.msra.mxu0 0.0
        %558 = vmatpush.msra.mxu0 0.0
        %559 = vmatpush.msra.mxu0 0.0
        %560 = vmatpush.msra.mxu0 0.0
        %561 = vmatpush.msra.mxu0 0.0
        %562 = vmatpush.msra.mxu0 0.0
        %563 = vmatpush.msra.mxu0 %v434
        %564 = vmatmul.f32.gmra.mxu0 %v543
        %v565 = vpop.f32.mrf.mxu0
        %v566 = vadd.f32 %v537, %v565
        %567 = vmatmul.f32.gmra.mxu0 %v546
        %v568 = vpop.f32.mrf.mxu0
        %v569 = vadd.f32 %v540, %v568
        %570 = vdwg.mxu0
        %s571 = sld [smem:[#allocation6]]
        %v572 = vstv %s571
        %v573 = vadd.f32 %v566, %v572
        %v574 = vadd.f32 %v569, %v572
        %vm575 = vcmask 261120
        %576 = vst.msk [vmem:[%s342] sm:$0xff] %vm575, %v573
        %577 = vst.msk [vmem:[%s342 + $0x8] sm:$0xff] %vm575, %v574
        %s578 = sld [smem:[#allocation2 + $0x4]]
        %s579 = sld [smem:[#allocation2 + $0x10]]
        %v580 = vstv %s578
        %v581 = vmul.f32 %v580, %v352
        %v582 = vstv %s579
        %v583 = vmul.f32 %v582, %v352
        %s584 = sld [smem:[#allocation2 + $0x5]]
        %s585 = sld [smem:[#allocation2 + $0x11]]
        %v586 = vstv %s584
        %v587 = vmul.f32 %v586, %v354
        %v588 = vadd.f32 %v581, %v587
        %v589 = vstv %s585
        %v590 = vmul.f32 %v589, %v354
        %v591 = vadd.f32 %v583, %v590
        %s592 = sld [smem:[#allocation2 + $0x6]]
        %s593 = sld [smem:[#allocation2 + $0x12]]
        %v594 = vstv %s592
        %v595 = vmul.f32 %v594, %v356
        %v596 = vadd.f32 %v588, %v595
        %v597 = vstv %s593
        %v598 = vmul.f32 %v597, %v356
        %v599 = vadd.f32 %v591, %v598
        %s600 = sld [smem:[#allocation2 + $0x7]]
        %s601 = sld [smem:[#allocation2 + $0x13]]
        %v602 = vstv %s600
        %v603 = vmul.f32 %v602, %v358
        %v604 = vadd.f32 %v596, %v603
        %v605 = vstv %s601
        %v606 = vmul.f32 %v605, %v358
        %v607 = vadd.f32 %v599, %v606
        %v609 = vsel %vm389, %v607, 0
        %611 = vmatpush.msra.mxu0 0.0
        %612 = vmatpush.msra.mxu0 0.0
        %613 = vmatpush.msra.mxu0 0.0
        %614 = vmatpush.msra.mxu0 0.0
        %615 = vmatpush.msra.mxu0 0.0
        %616 = vmatpush.msra.mxu0 0.0
        %617 = vmatpush.msra.mxu0 0.0
        %618 = vmatpush.msra.mxu0 0.0
        %619 = vmatpush.msra.mxu0 0.0
        %620 = vmatpush.msra.mxu0 0.0
        %621 = vmatpush.msra.mxu0 0.0
        %622 = vmatpush.msra.mxu0 0.0
        %623 = vmatpush.msra.mxu0 0.0
        %624 = vmatpush.msra.mxu0 0.0
        %625 = vmatpush.msra.mxu0 %v347
        %626 = vmatpush.msra.mxu0 %v346
        %627 = vmatmul.f32.gmra.mxu0 %v609
        %v628 = vpop.f32.mrf.mxu0
        %v629 = vadd.f32 0.0, %v628
        %630 = vdwg.mxu0
        %v632 = vsel %vm389, %v604, 0
        %634 = vmatpush.msra.mxu0 0.0
        %635 = vmatpush.msra.mxu0 0.0
        %636 = vmatpush.msra.mxu0 0.0
        %637 = vmatpush.msra.mxu0 0.0
        %638 = vmatpush.msra.mxu0 0.0
        %639 = vmatpush.msra.mxu0 0.0
        %640 = vmatpush.msra.mxu0 0.0
        %641 = vmatpush.msra.mxu0 0.0
        %642 = vmatpush.msra.mxu0 0.0
        %643 = vmatpush.msra.mxu0 0.0
        %644 = vmatpush.msra.mxu0 0.0
        %645 = vmatpush.msra.mxu0 0.0
        %646 = vmatpush.msra.mxu0 0.0
        %647 = vmatpush.msra.mxu0 0.0
        %648 = vmatpush.msra.mxu0 %v345
        %649 = vmatpush.msra.mxu0 %v344
        %650 = vmatmul.f32.gmra.mxu0 %v632
        %v651 = vpop.f32.mrf.mxu0
        %v652 = vadd.f32 %v629, %v651
        %653 = vdwg.mxu0
        %s654 = sld [smem:[#allocation2 + $0x1c]]
        %s655 = sld [smem:[#allocation2 + $0x28]]
        %v656 = vstv %s654
        %v657 = vmul.f32 %v656, %v352
        %v658 = vstv %s655
        %v659 = vmul.f32 %v658, %v352
        %s660 = sld [smem:[#allocation2 + $0x1d]]
        %s661 = sld [smem:[#allocation2 + $0x29]]
        %v662 = vstv %s660
        %v663 = vmul.f32 %v662, %v354
        %v664 = vadd.f32 %v657, %v663
        %v665 = vstv %s661
        %v666 = vmul.f32 %v665, %v354
        %v667 = vadd.f32 %v659, %v666
        %s668 = sld [smem:[#allocation2 + $0x1e]]
        %s669 = sld [smem:[#allocation2 + $0x2a]]
        %v670 = vstv %s668
        %v671 = vmul.f32 %v670, %v356
        %v672 = vadd.f32 %v664, %v671
        %v673 = vstv %s669
        %v674 = vmul.f32 %v673, %v356
        %v675 = vadd.f32 %v667, %v674
        %s676 = sld [smem:[#allocation2 + $0x1f]]
        %s677 = sld [smem:[#allocation2 + $0x2b]]
        %v678 = vstv %s676
        %v679 = vmul.f32 %v678, %v358
        %v680 = vadd.f32 %v672, %v679
        %v681 = vstv %s677
        %v682 = vmul.f32 %v681, %v358
        %v683 = vadd.f32 %v675, %v682
        %v685 = vsel %vm389, %v683, 0
        %687 = vmatpush.msra.mxu0 0.0
        %688 = vmatpush.msra.mxu0 0.0
        %689 = vmatpush.msra.mxu0 0.0
        %690 = vmatpush.msra.mxu0 0.0
        %691 = vmatpush.msra.mxu0 0.0
        %692 = vmatpush.msra.mxu0 0.0
        %693 = vmatpush.msra.mxu0 0.0
        %694 = vmatpush.msra.mxu0 0.0
        %695 = vmatpush.msra.mxu0 0.0
        %696 = vmatpush.msra.mxu0 0.0
        %697 = vmatpush.msra.mxu0 0.0
        %698 = vmatpush.msra.mxu0 0.0
        %699 = vmatpush.msra.mxu0 0.0
        %700 = vmatpush.msra.mxu0 0.0
        %701 = vmatpush.msra.mxu0 %v347
        %702 = vmatpush.msra.mxu0 %v346
        %703 = vmatmul.f32.gmra.mxu0 %v685
        %v704 = vpop.f32.mrf.mxu0
        %v705 = vadd.f32 0.0, %v704
        %706 = vdwg.mxu0
        %v708 = vsel %vm389, %v680, 0
        %710 = vmatpush.msra.mxu0 0.0
        %711 = vmatpush.msra.mxu0 0.0
        %712 = vmatpush.msra.mxu0 0.0
        %713 = vmatpush.msra.mxu0 0.0
        %714 = vmatpush.msra.mxu0 0.0
        %715 = vmatpush.msra.mxu0 0.0
        %716 = vmatpush.msra.mxu0 0.0
        %717 = vmatpush.msra.mxu0 0.0
        %718 = vmatpush.msra.mxu0 0.0
        %719 = vmatpush.msra.mxu0 0.0
        %720 = vmatpush.msra.mxu0 0.0
        %721 = vmatpush.msra.mxu0 0.0
        %722 = vmatpush.msra.mxu0 0.0
        %723 = vmatpush.msra.mxu0 0.0
        %724 = vmatpush.msra.mxu0 %v345
        %725 = vmatpush.msra.mxu0 %v344
        %726 = vmatmul.f32.gmra.mxu0 %v708
        %v727 = vpop.f32.mrf.mxu0
        %v728 = vadd.f32 %v705, %v727
        %729 = vdwg.mxu0
        %730 = vmatpush.msra.mxu0 0.0
        %731 = vmatpush.msra.mxu0 0.0
        %732 = vmatpush.msra.mxu0 0.0
        %733 = vmatpush.msra.mxu0 0.0
        %734 = vmatpush.msra.mxu0 0.0
        %735 = vmatpush.msra.mxu0 0.0
        %736 = vmatpush.msra.mxu0 0.0
        %737 = vmatpush.msra.mxu0 0.0
        %738 = vmatpush.msra.mxu0 0.0
        %739 = vmatpush.msra.mxu0 0.0
        %740 = vmatpush.msra.mxu0 0.0
        %741 = vmatpush.msra.mxu0 0.0
        %742 = vmatpush.msra.mxu0 0.0
        %743 = vmatpush.msra.mxu0 0.0
        %744 = vmatpush.msra.mxu0 0.0
        %745 = vmatpush.msra.mxu0 %v728
        %746 = vmatmul.f32.gmra.mxu0 %v514
        %v747 = vpop.f32.mrf.mxu0
        %v748 = vadd.f32 0.0, %v747
        %749 = vmatmul.f32.gmra.mxu0 %v517
        %v750 = vpop.f32.mrf.mxu0
        %v751 = vadd.f32 0.0, %v750
        %752 = vdwg.mxu0
        %753 = vmatpush.msra.mxu0 0.0
        %754 = vmatpush.msra.mxu0 0.0
        %755 = vmatpush.msra.mxu0 0.0
        %756 = vmatpush.msra.mxu0 0.0
        %757 = vmatpush.msra.mxu0 0.0
        %758 = vmatpush.msra.mxu0 0.0
        %759 = vmatpush.msra.mxu0 0.0
        %760 = vmatpush.msra.mxu0 0.0
        %761 = vmatpush.msra.mxu0 0.0
        %762 = vmatpush.msra.mxu0 0.0
        %763 = vmatpush.msra.mxu0 0.0
        %764 = vmatpush.msra.mxu0 0.0
        %765 = vmatpush.msra.mxu0 0.0
        %766 = vmatpush.msra.mxu0 0.0
        %767 = vmatpush.msra.mxu0 0.0
        %768 = vmatpush.msra.mxu0 %v652
        %769 = vmatmul.f32.gmra.mxu0 %v543
        %v770 = vpop.f32.mrf.mxu0
        %v771 = vadd.f32 %v748, %v770
        %772 = vmatmul.f32.gmra.mxu0 %v546
        %v773 = vpop.f32.mrf.mxu0
        %v774 = vadd.f32 %v751, %v773
        %775 = vdwg.mxu0
        %s776 = sld [smem:[#allocation6 + $0x1]]
        %v777 = vstv %s776
        %v778 = vadd.f32 %v771, %v777
        %v779 = vadd.f32 %v774, %v777
        %s780 = scalar_lea.vmem %s342, 16 [#allocation9]
        %781 = vst.msk [vmem:[%s780] sm:$0xff] %vm575, %v778
        %782 = vst.msk [vmem:[%s780 + $0x8] sm:$0xff] %vm575, %v779
        %s783 = sld [smem:[#allocation2 + $0x8]]
        %s784 = sld [smem:[#allocation2 + $0x14]]
        %v785 = vstv %s783
        %v786 = vmul.f32 %v785, %v352
        %v787 = vstv %s784
        %v788 = vmul.f32 %v787, %v352
        %s789 = sld [smem:[#allocation2 + $0x9]]
        %s790 = sld [smem:[#allocation2 + $0x15]]
        %v791 = vstv %s789
        %v792 = vmul.f32 %v791, %v354
        %v793 = vadd.f32 %v786, %v792
        %v794 = vstv %s790
        %v795 = vmul.f32 %v794, %v354
        %v796 = vadd.f32 %v788, %v795
        %s797 = sld [smem:[#allocation2 + $0xa]]
        %s798 = sld [smem:[#allocation2 + $0x16]]
        %v799 = vstv %s797
        %v800 = vmul.f32 %v799, %v356
        %v801 = vadd.f32 %v793, %v800
        %v802 = vstv %s798
        %v803 = vmul.f32 %v802, %v356
        %v804 = vadd.f32 %v796, %v803
        %s805 = sld [smem:[#allocation2 + $0xb]]
        %s806 = sld [smem:[#allocation2 + $0x17]]
        %v807 = vstv %s805
        %v808 = vmul.f32 %v807, %v358
        %v809 = vadd.f32 %v801, %v808
        %v810 = vstv %s806
        %v811 = vmul.f32 %v810, %v358
        %v812 = vadd.f32 %v804, %v811
        %v814 = vsel %vm389, %v812, 0
        %816 = vmatpush.msra.mxu0 0.0
        %817 = vmatpush.msra.mxu0 0.0
        %818 = vmatpush.msra.mxu0 0.0
        %819 = vmatpush.msra.mxu0 0.0
        %820 = vmatpush.msra.mxu0 0.0
        %821 = vmatpush.msra.mxu0 0.0
        %822 = vmatpush.msra.mxu0 0.0
        %823 = vmatpush.msra.mxu0 0.0
        %824 = vmatpush.msra.mxu0 0.0
        %825 = vmatpush.msra.mxu0 0.0
        %826 = vmatpush.msra.mxu0 0.0
        %827 = vmatpush.msra.mxu0 0.0
        %828 = vmatpush.msra.mxu0 0.0
        %829 = vmatpush.msra.mxu0 0.0
        %830 = vmatpush.msra.mxu0 %v347
        %831 = vmatpush.msra.mxu0 %v346
        %832 = vmatmul.f32.gmra.mxu0 %v814
        %v833 = vpop.f32.mrf.mxu0
        %v834 = vadd.f32 0.0, %v833
        %835 = vdwg.mxu0
        %v837 = vsel %vm389, %v809, 0
        %839 = vmatpush.msra.mxu0 0.0
        %840 = vmatpush.msra.mxu0 0.0
        %841 = vmatpush.msra.mxu0 0.0
        %842 = vmatpush.msra.mxu0 0.0
        %843 = vmatpush.msra.mxu0 0.0
        %844 = vmatpush.msra.mxu0 0.0
        %845 = vmatpush.msra.mxu0 0.0
        %846 = vmatpush.msra.mxu0 0.0
        %847 = vmatpush.msra.mxu0 0.0
        %848 = vmatpush.msra.mxu0 0.0
        %849 = vmatpush.msra.mxu0 0.0
        %850 = vmatpush.msra.mxu0 0.0
        %851 = vmatpush.msra.mxu0 0.0
        %852 = vmatpush.msra.mxu0 0.0
        %853 = vmatpush.msra.mxu0 %v345
        %854 = vmatpush.msra.mxu0 %v344
        %855 = vmatmul.f32.gmra.mxu0 %v837
        %v856 = vpop.f32.mrf.mxu0
        %v857 = vadd.f32 %v834, %v856
        %858 = vdwg.mxu0
        %s859 = sld [smem:[#allocation2 + $0x20]]
        %s860 = sld [smem:[#allocation2 + $0x2c]]
        %v861 = vstv %s859
        %v862 = vmul.f32 %v861, %v352
        %v863 = vstv %s860
        %v864 = vmul.f32 %v863, %v352
        %s865 = sld [smem:[#allocation2 + $0x21]]
        %s866 = sld [smem:[#allocation2 + $0x2d]]
        %v867 = vstv %s865
        %v868 = vmul.f32 %v867, %v354
        %v869 = vadd.f32 %v862, %v868
        %v870 = vstv %s866
        %v871 = vmul.f32 %v870, %v354
        %v872 = vadd.f32 %v864, %v871
        %s873 = sld [smem:[#allocation2 + $0x22]]
        %s874 = sld [smem:[#allocation2 + $0x2e]]
        %v875 = vstv %s873
        %v876 = vmul.f32 %v875, %v356
        %v877 = vadd.f32 %v869, %v876
        %v878 = vstv %s874
        %v879 = vmul.f32 %v878, %v356
        %v880 = vadd.f32 %v872, %v879
        %s881 = sld [smem:[#allocation2 + $0x23]]
        %s882 = sld [smem:[#allocation2 + $0x2f]]
        %v883 = vstv %s881
        %v884 = vmul.f32 %v883, %v358
        %v885 = vadd.f32 %v877, %v884
        %v886 = vstv %s882
        %v887 = vmul.f32 %v886, %v358
        %v888 = vadd.f32 %v880, %v887
        %v890 = vsel %vm389, %v888, 0
        %892 = vmatpush.msra.mxu0 0.0
        %893 = vmatpush.msra.mxu0 0.0
        %894 = vmatpush.msra.mxu0 0.0
        %895 = vmatpush.msra.mxu0 0.0
        %896 = vmatpush.msra.mxu0 0.0
        %897 = vmatpush.msra.mxu0 0.0
        %898 = vmatpush.msra.mxu0 0.0
        %899 = vmatpush.msra.mxu0 0.0
        %900 = vmatpush.msra.mxu0 0.0
        %901 = vmatpush.msra.mxu0 0.0
        %902 = vmatpush.msra.mxu0 0.0
        %903 = vmatpush.msra.mxu0 0.0
        %904 = vmatpush.msra.mxu0 0.0
        %905 = vmatpush.msra.mxu0 0.0
        %906 = vmatpush.msra.mxu0 %v347
        %907 = vmatpush.msra.mxu0 %v346
        %908 = vmatmul.f32.gmra.mxu0 %v890
        %v909 = vpop.f32.mrf.mxu0
        %v910 = vadd.f32 0.0, %v909
        %911 = vdwg.mxu0
        %v913 = vsel %vm389, %v885, 0
        %915 = vmatpush.msra.mxu0 0.0
        %916 = vmatpush.msra.mxu0 0.0
        %917 = vmatpush.msra.mxu0 0.0
        %918 = vmatpush.msra.mxu0 0.0
        %919 = vmatpush.msra.mxu0 0.0
        %920 = vmatpush.msra.mxu0 0.0
        %921 = vmatpush.msra.mxu0 0.0
        %922 = vmatpush.msra.mxu0 0.0
        %923 = vmatpush.msra.mxu0 0.0
        %924 = vmatpush.msra.mxu0 0.0
        %925 = vmatpush.msra.mxu0 0.0
        %926 = vmatpush.msra.mxu0 0.0
        %927 = vmatpush.msra.mxu0 0.0
        %928 = vmatpush.msra.mxu0 0.0
        %929 = vmatpush.msra.mxu0 %v345
        %930 = vmatpush.msra.mxu0 %v344
        %931 = vmatmul.f32.gmra.mxu0 %v913
        %v932 = vpop.f32.mrf.mxu0
        %v933 = vadd.f32 %v910, %v932
        %934 = vdwg.mxu0
        %935 = vmatpush.msra.mxu0 0.0
        %936 = vmatpush.msra.mxu0 0.0
        %937 = vmatpush.msra.mxu0 0.0
        %938 = vmatpush.msra.mxu0 0.0
        %939 = vmatpush.msra.mxu0 0.0
        %940 = vmatpush.msra.mxu0 0.0
        %941 = vmatpush.msra.mxu0 0.0
        %942 = vmatpush.msra.mxu0 0.0
        %943 = vmatpush.msra.mxu0 0.0
        %944 = vmatpush.msra.mxu0 0.0
        %945 = vmatpush.msra.mxu0 0.0
        %946 = vmatpush.msra.mxu0 0.0
        %947 = vmatpush.msra.mxu0 0.0
        %948 = vmatpush.msra.mxu0 0.0
        %949 = vmatpush.msra.mxu0 0.0
        %950 = vmatpush.msra.mxu0 %v933
        %951 = vmatmul.f32.gmra.mxu0 %v514
        %v952 = vpop.f32.mrf.mxu0
        %v953 = vadd.f32 0.0, %v952
        %954 = vmatmul.f32.gmra.mxu0 %v517
        %v955 = vpop.f32.mrf.mxu0
        %v956 = vadd.f32 0.0, %v955
        %957 = vdwg.mxu0
        %958 = vmatpush.msra.mxu0 0.0
        %959 = vmatpush.msra.mxu0 0.0
        %960 = vmatpush.msra.mxu0 0.0
        %961 = vmatpush.msra.mxu0 0.0
        %962 = vmatpush.msra.mxu0 0.0
        %963 = vmatpush.msra.mxu0 0.0
        %964 = vmatpush.msra.mxu0 0.0
        %965 = vmatpush.msra.mxu0 0.0
        %966 = vmatpush.msra.mxu0 0.0
        %967 = vmatpush.msra.mxu0 0.0
        %968 = vmatpush.msra.mxu0 0.0
        %969 = vmatpush.msra.mxu0 0.0
        %970 = vmatpush.msra.mxu0 0.0
        %971 = vmatpush.msra.mxu0 0.0
        %972 = vmatpush.msra.mxu0 0.0
        %973 = vmatpush.msra.mxu0 %v857
        %974 = vmatmul.f32.gmra.mxu0 %v543
        %v975 = vpop.f32.mrf.mxu0
        %v976 = vadd.f32 %v953, %v975
        %977 = vmatmul.f32.gmra.mxu0 %v546
        %v978 = vpop.f32.mrf.mxu0
        %v979 = vadd.f32 %v956, %v978
        %980 = vdwg.mxu0
        %s981 = sld [smem:[#allocation6 + $0x2]]
        %v982 = vstv %s981
        %v983 = vadd.f32 %v976, %v982
        %v984 = vadd.f32 %v979, %v982
        %s985 = scalar_lea.vmem %s342, 32 [#allocation9]
        %986 = vst.msk [vmem:[%s985] sm:$0xff] %vm575, %v983
        %987 = vst.msk [vmem:[%s985 + $0x8] sm:$0xff] %vm575, %v984
        %s988 = sand.u32 %s202, 1
        %s989 = scalar_lea.sflag [#allocation4], %s988
        %s990 = sand.u32 %s202, 1
        %s991 = smul.addr %s990, 48
        %s992 = scalar_lea.vmem [#allocation9], %s991
        // Predicated region
        $region61: #{tpu_custom_call.1} parent=47 // pred_check
          %p993 = pneg %p212
        $region62: #{tpu_custom_call.1} parent=47 // pred_check_branch
          %995 = sbr.rel (%p993) target = $region64
        $region63: #{tpu_custom_call.1} parent=47 // pred_region
          #allocation11 [shape = 'u32[6]{0}', space=smem, size = 0x18, scoped, tag = 'DMA stride descriptor']
          %s996 = smul.u32 2, %s31
          %998 = vsyncadd %s989, 0
          %s999 = smul.addr %s30, 12
          %s1000 = sadd.s32 %s996, %s999
          %s1001 = smul.addr %s1000, 8
          %s1002 = scalar_lea.hbm %s7, %s1001
          %s1004 = sshll.u32 1, 14
          %s1005 = sxor.u32 4294967295, %s1004
          %s1008 = sshll.u32 7, 18
          %s1009 = sxor.u32 4294967295, %s1008
          %s1010 = sand.u32 0, %s1009
          %s1012 = sor.u32 %s1010, 0
          %s1013 = sshll.u32 %s992, 4
          %s1014 = int_to_ptr.vmem [resolvable:$true] %s1013
          %s1015 = sshll.u32 %s1002, 4
          %s1016 = int_to_ptr.hbm [resolvable:$true] %s1015
          %1022 = sst [smem:[#allocation11]] 256
          %s1023 = scalar_lea.smem [#allocation11], 1
          %1024 = sst [smem:[%s1023]] 512
          %s1025 = scalar_lea.smem [#allocation11], 2
          %1026 = sst [smem:[%s1025]] 2
          %s1027 = scalar_lea.smem [#allocation11], 3
          %1028 = sst [smem:[%s1027]] 128
          %s1029 = scalar_lea.smem [#allocation11], 4
          %1030 = sst [smem:[%s1029]] 128
          %s1031 = scalar_lea.smem [#allocation11], 5
          %1032 = sst [smem:[%s1031]] 8
          %1034 = dma.general %s1014, 768, %s1016, %s989, [#allocation10], [#allocation11], %s1012, 0
        $region64: #{tpu_custom_call.1} parent=47 // pred_fallthru
          _
      $region48: #{tpu_custom_call.1} parent=5 // pred_fallthru
        _
      %p1035 = scmp.le.s32.totalorder 2, %s21
      // Predicated region
      $region65: #{tpu_custom_call.1} parent=5 // pred_check
        %p1036 = pneg %p1035
      $region66: #{tpu_custom_call.1} parent=5 // pred_check_branch
        %1038 = sbr.rel (%p1036) target = $region68
      $region67: #{tpu_custom_call.1} parent=5 // pred_region
        %s1039 = ssub.s32 %s21, 2
        // Predicated region
        $region69: #{tpu_custom_call.1} parent=67 // pred_check
          %p1040 = pneg %p218
        $region70: #{tpu_custom_call.1} parent=67 // pred_check_branch
          %1042 = sbr.rel (%p1040) target = $region72
        $region71: #{tpu_custom_call.1} parent=67 // pred_region
          %s1043 = sand.u32 %s203, 1
          %s1044 = scalar_lea.sflag [#allocation4], %s1043
          %s1045 = sand.u32 %s203, 1
          %s1046 = smul.addr %s1045, 48
          %s1047 = scalar_lea.vmem [#allocation9], %s1046
          %1049 = dma.done %s1044, 768
        $region72: #{tpu_custom_call.1} parent=67 // pred_fallthru
          _
      $region68: #{tpu_custom_call.1} parent=5 // pred_fallthru
        _
    $region6: #{tpu_custom_call.1} parent=1 // loop_footer
      %s25 = sadd.s32 1, %s21
    $region7: #{tpu_custom_call.1} parent=1 // loop_footer_branch
      %20 = sbr.rel target = $region3
    $region8: #{tpu_custom_call.1} parent=1 // loop_exit
      _
    %1050 = vsyncpa [#allocation3], 1
    %s1051 = scalar_lea.sflag [#allocation3], 1
    %1052 = vsyncpa %s1051, 1
    %1053 = vsyncpa [#allocation4], 1
    %s1054 = scalar_lea.sflag [#allocation4], 1
    %1055 = vsyncpa %s1054, 1
    %1056 = vsyncpa [#allocation5], 1
    %s1057 = scalar_lea.sflag [#allocation5], 1
    %1058 = vsyncpa %s1057, 1
    %1059 = vsyncpa [#allocation7], 1

</llo_original>
